<compile_context>
chip_gen: v7x
topology: tpu7x:2x2x1
jax: 0.10.0
libtpu: 0.0.40
codegen_flags: <defaults>
</compile_context>

<pallas_src>
import numpy as np
import jax
import jax.numpy as jnp
from jax import lax
from jax.experimental import pallas as pl
from jax.experimental.pallas import tpu as pltpu

_LN_EPS = 1e-5  # torch.nn.LayerNorm default (fresh LN => identity affine)


def _make_kernel(T, Tc, Bp, I, C, H, O, alpha, num_steps, mm_dtype):
    alpha = float(alpha)
    inv_h = 1.0 / float(H)

    def kernel(x_ref, ctx0_ref, wcc_ref, wic_ref, bcic_ref,
               wih_ref, bih_ref, whh_ref, bhh_ref,
               wcom_ref, bcom_ref, seg_sum_ref, seg_bcast_ref, rep_ref,
               out_ref, ctxf_ref,
               ctx_carry, xc_scr, h1_scr, ctxh_scr):
        chunk = pl.program_id(0)

        @pl.when(chunk == 0)
        def _():
            ctx_carry[...] = ctx0_ref[...]

        # ---------------- prologue: x-only path for the whole chunk ----------
        x2d = x_ref[...]                                           # (Tc*Bp, I)

        # input -> context projection with b_ic + b_cc pre-folded
        xc_scr[...] = (jnp.dot(x2d, wic_ref[...],
                               preferred_element_type=jnp.float32)
                       + bcic_ref[...])                            # (Tc*Bp, C)

        # hidden path: h0 = relu(x@W_ih + b_ih); h1 = relu(h0@W_hh + b_hh) + h0
        h0 = jnp.maximum(
            jnp.dot(x2d, wih_ref[...], preferred_element_type=jnp.float32)
            + bih_ref[...], 0.0)
        h1_scr[...] = jnp.maximum(
            jnp.dot(h0.astype(mm_dtype), whh_ref[...],
                    preferred_element_type=jnp.float32)
            + bhh_ref[...], 0.0) + h0                              # (Tc*Bp, H)

        # ------------- serial recurrence: only the tiny ctx update ----------
        wcc = wcc_ref[...]                                         # (C, C), f32

        def ctx_update(ctx, xc_t):
            ctx_new = jnp.maximum(
                jnp.dot(ctx, wcc, preferred_element_type=jnp.float32) + xc_t,
                0.0)
            return ctx * (1.0 - alpha) + ctx_new * alpha

        # number of valid timesteps in this chunk (last chunk may be ragged)
        nt = jnp.minimum(Tc, T - chunk * Tc)

        def step(t, ctx):
            base = pl.multiple_of(t * Bp, Bp)
            xc_t = xc_scr[pl.ds(base, Bp), :]                      # (Bp, C)
            # context-only inner iterations (their outputs are discarded)
            for _ in range(num_steps - 1):
                ctx = ctx_update(ctx, xc_t)
            # stash context *before* the final (kept) update: the output map
            # of this timestep is computed from it in the epilogue.
            ctxh_scr[pl.ds(base, Bp), :] = ctx
            return ctx_update(ctx, xc_t)

        ctx_f = lax.fori_loop(0, nt, step, ctx_carry[...])
        ctx_carry[...] = ctx_f
        ctxf_ref[...] = ctx_f

        # ------------- epilogue: output map for the whole chunk -------------
        # One lane-dense matmul over all timesteps of the chunk.
        om = (jnp.dot(ctxh_scr[...].astype(mm_dtype), wcom_ref[...],
                      preferred_element_type=jnp.float32)
              + bcom_ref[...])                                     # (Tc*Bp, O*H)

        S = seg_sum_ref[...]      # (O*H, O): column o sums the o-th H-segment
        Bm = seg_bcast_ref[...]   # (O, O*H): broadcasts per-o scalars back

        # segment-wise LayerNorm over H (identity affine, biased variance)
        mu = jnp.dot(jnp.dot(om, S, preferred_element_type=jnp.float32) * inv_h,
                     Bm, preferred_element_type=jnp.float32)
        cen = om - mu
        var = jnp.dot(cen * cen, S, preferred_element_type=jnp.float32) * inv_h
        rstd = jnp.dot(lax.rsqrt(var + _LN_EPS), Bm,
                       preferred_element_type=jnp.float32)
        omn = cen * rstd                                           # (Tc*Bp, O*H)

        # output[tb, o] = sum_h omn[tb, o*H + h] * h1[tb, h]
        h1_rep = jnp.dot(h1_scr[...], rep_ref[...],
                         preferred_element_type=jnp.float32)       # (Tc*Bp, O*H)
        out_ref[...] = jnp.dot(omn * h1_rep, S,
                               preferred_element_type=jnp.float32)  # (Tc*Bp, O)

    return kernel


def output_map_rnn_forward(x, ctx0, params, *, num_steps=1, alpha=1.0,
                           compute_dtype=jnp.float32, t_chunk=None):
    """Pallas implementation of OutputMapRNNNet.forward -> (outputs, context)."""
    T, B, I = x.shape
    C = ctx0.shape[1]
    H = params["w_hh"].shape[0]
    O = params["w_com"].shape[1] // H

    # pad batch to the sublane width (8 for f32, 16 for sub-32-bit MXU operands)
    sub = 8 if np.dtype(compute_dtype).itemsize >= 4 else 16
    Bp = max(sub, -(-B // sub) * sub)
    if Bp != B:
        x = jnp.pad(x, ((0, 0), (0, Bp - B), (0, 0)))
        ctx0 = jnp.pad(ctx0, ((0, Bp - B), (0, 0)))

    # chunk the time axis: keep t_chunk*Bp matmul rows MXU-friendly while
    # bounding per-chunk VMEM (shrink t_chunk / this target on v7x's 64 MiB).
    if t_chunk is None:
        t_chunk = max(1, 512 // Bp)
    t_chunk = min(t_chunk, T)
    n_chunks = -(-T // t_chunk)
    Tpad = n_chunks * t_chunk
    if Tpad != T:  # ragged last chunk: pad x; the in-kernel loop bound masks it
        x = jnp.pad(x, ((0, Tpad - T), (0, 0), (0, 0)))
    rows = t_chunk * Bp

    # wrapper-side layout plumbing / constant folding (no compute hoisted)
    x2d = x.reshape(Tpad * Bp, I).astype(compute_dtype)
    b_cic = (params["b_ic"] + params["b_cc"]).astype(jnp.float32)   # (1, C)
    w_cc = params["w_cc"].astype(jnp.float32)       # tiny recurrence stays f32
    w_ic = params["w_ic"].astype(compute_dtype)
    w_ih = params["w_ih"].astype(compute_dtype)
    w_hh = params["w_hh"].astype(compute_dtype)
    w_com = params["w_com"].astype(compute_dtype)   # (C, O*H), lane-dense
    b_com = params["b_com"].astype(jnp.float32)     # (1, O*H)

    # constant 0/1 masks for segment-wise LayerNorm / reduction (flat col o*H+h)
    seg_sum_np = np.kron(np.eye(O, dtype=np.float32),
                         np.ones((H, 1), dtype=np.float32))          # (O*H, O)
    rep_np = np.tile(np.eye(H, dtype=np.float32), (1, O))            # (H, O*H)
    seg_sum = jnp.asarray(seg_sum_np)
    seg_bcast = jnp.asarray(seg_sum_np.T)                            # (O, O*H)
    rep = jnp.asarray(rep_np)

    kernel = _make_kernel(T, t_chunk, Bp, I, C, H, O, alpha, num_steps,
                          compute_dtype)

    def const_spec(shape):
        zeros = (0,) * len(shape)
        return pl.BlockSpec(shape, lambda c, _z=zeros: _z)

    out_raw, ctx_out = pl.pallas_call(
        kernel,
        out_shape=(jax.ShapeDtypeStruct((Tpad * Bp, O), jnp.float32),
                   jax.ShapeDtypeStruct((Bp, C), jnp.float32)),
        grid=(n_chunks,),
        in_specs=[
            pl.BlockSpec((rows, I), lambda c: (c, 0)),  # x chunk (pipelined DMA)
            const_spec((Bp, C)),       # initial context
            const_spec((C, C)),        # W context2context
            const_spec((I, C)),        # W input2context
            const_spec((1, C)),        # b_ic + b_cc (folded)
            const_spec((I, H)),        # W input2hidden (BasicResidualNN.fc1)
            const_spec((1, H)),        # b input2hidden
            const_spec((H, H)),        # W hidden2hidden
            const_spec((1, H)),        # b hidden2hidden
            const_spec((C, O * H)),    # W context2output_map (flat, lane-dense)
            const_spec((1, O * H)),    # b context2output_map
            const_spec((O * H, O)),    # segment-sum mask
            const_spec((O, O * H)),    # segment-broadcast mask
            const_spec((H, O * H)),    # h1 lane-replication mask
        ],
        out_specs=(pl.BlockSpec((rows, O), lambda c: (c, 0)),
                   const_spec((Bp, C))),
        scratch_shapes=[pltpu.VMEM((Bp, C), jnp.float32),     # carried context
                        pltpu.VMEM((rows, C), jnp.float32),   # x->context proj
                        pltpu.VMEM((rows, H), jnp.float32),   # hidden1 path
                        pltpu.VMEM((rows, C), jnp.float32)],  # pre-update ctx
        compiler_params=pltpu.CompilerParams(
            dimension_semantics=("arbitrary",)),
    )(x2d, ctx0.astype(jnp.float32), w_cc, w_ic, b_cic,
      w_ih, params["b_ih"], w_hh, params["b_hh"],
      w_com, b_com, seg_sum, seg_bcast, rep)

    outputs = out_raw.reshape(Tpad, Bp, O)[:T, :B, :]                # (T, B, O)
    return outputs, ctx_out[:B]


def init_params(key, input_size, context_size, hidden_size, output_size):
    """torch.nn.Linear-style U(-1/sqrt(fan_in), ...) init; weights pre-transposed."""
    def linear(key, fan_in, fan_out):
        kw, kb = jax.random.split(key)
        bound = 1.0 / np.sqrt(fan_in)
        w = jax.random.uniform(kw, (fan_in, fan_out), jnp.float32, -bound, bound)
        b = jax.random.uniform(kb, (1, fan_out), jnp.float32, -bound, bound)
        return w, b

    k1, k2, k3, k4, k5 = jax.random.split(key, 5)
    w_cc, b_cc = linear(k1, context_size, context_size)
    w_ic, b_ic = linear(k2, input_size, context_size)
    w_ih, b_ih = linear(k3, input_size, hidden_size)
    w_hh, b_hh = linear(k4, hidden_size, hidden_size)
    w_com, b_com = linear(k5, context_size, hidden_size * output_size)
    return dict(w_cc=w_cc, b_cc=b_cc, w_ic=w_ic, b_ic=b_ic,
                w_ih=w_ih, b_ih=b_ih, w_hh=w_hh, b_hh=b_hh,
                w_com=w_com, b_com=b_com)


def reference_forward(x, ctx0, params, *, num_steps=1, alpha=1.0,
                      compute_dtype=jnp.float32):
    """Pure-JAX reference mirroring the PyTorch module (optionally with the
    same bf16 matmul-operand casts as the kernel for matched-precision tests)."""
    T, B, I = x.shape
    H = params["w_hh"].shape[0]
    O = params["w_com"].shape[1] // H
    cast = lambda a: a.astype(compute_dtype)
    f32 = jnp.float32
    w_ic, w_ih = cast(params["w_ic"]), cast(params["w_ih"])
    w_hh, w_com = cast(params["w_hh"]), cast(params["w_com"])
    ctx = ctx0
    outs = []
    for t in range(T):
        xt = cast(x[t])
        out = None
        for _ in range(num_steps):
            om = (jnp.dot(cast(ctx), w_com, preferred_element_type=f32)
                  + params["b_com"]).reshape(B, O, H)
            mu = om.mean(-1, keepdims=True)
            var = ((om - mu) ** 2).mean(-1, keepdims=True)
            omn = (om - mu) / jnp.sqrt(var + _LN_EPS)   # fresh LN, identity affine
            ctx_new = jax.nn.relu(
                ctx @ params["w_cc"] + params["b_cc"]
                + jnp.dot(xt, w_ic, preferred_element_type=f32) + params["b_ic"])
            ctx = ctx * (1.0 - alpha) + ctx_new * alpha
            h0 = jax.nn.relu(jnp.dot(xt, w_ih, preferred_element_type=f32)
                             + params["b_ih"])
            h1 = jax.nn.relu(jnp.dot(cast(h0), w_hh, preferred_element_type=f32)
                             + params["b_hh"]) + h0
            out = jnp.einsum("boh,bh->bo", omn, h1)
        outs.append(out)
    return jnp.stack(outs, axis=0), ctx


if __name__ == "__main__":
    # x is (seq, batch, input_size), as in the module's forward.
    SEQ, BATCH, INPUT, CONTEXT, HIDDEN, OUTPUT = 8, 4, 16, 32, 32, 8
    ALPHA = 1.0  # dt=None in the module => alpha = 1.0

    key = jax.random.PRNGKey(0)
    k_x, k_p = jax.random.split(key)

    x = jax.random.normal(k_x, (SEQ, BATCH, INPUT), jnp.float32)
    params = init_params(k_p, INPUT, CONTEXT, HIDDEN, OUTPUT)
    ctx0 = jnp.zeros((BATCH, CONTEXT), jnp.float32)  # init_hidden()

    # f32 path: exact module semantics.
    # (num_steps=1, single chunk) / (num_steps=2) / (t_chunk=3 -> ragged chunks)
    for num_steps, t_chunk in ((1, None), (2, None), (1, 3)):
        outputs, ctx_final = output_map_rnn_forward(
            x, ctx0, params, num_steps=num_steps, alpha=ALPHA, t_chunk=t_chunk)
        outputs = jax.block_until_ready(outputs)
        ctx_final = jax.block_until_ready(ctx_final)
        ref_out, ref_ctx = reference_forward(
            x, ctx0, params, num_steps=num_steps, alpha=ALPHA)
        np.testing.assert_allclose(np.asarray(outputs), np.asarray(ref_out),
                                   rtol=1e-4, atol=1e-4)
        np.testing.assert_allclose(np.asarray(ctx_final), np.asarray(ref_ctx),
                                   rtol=1e-4, atol=1e-4)

    # bf16 MXU operands (f32 accumulation), checked against a matched-precision
    # reference that applies the same operand casts.
    outputs, ctx_final = output_map_rnn_forward(
        x, ctx0, params, num_steps=1, alpha=ALPHA, compute_dtype=jnp.bfloat16)
    outputs = jax.block_until_ready(outputs)
    ctx_final = jax.block_until_ready(ctx_final)
    ref_out, ref_ctx = reference_forward(
        x, ctx0, params, num_steps=1, alpha=ALPHA, compute_dtype=jnp.bfloat16)
    np.testing.assert_allclose(np.asarray(outputs), np.asarray(ref_out),
                               rtol=5e-3, atol=5e-3)
    np.testing.assert_allclose(np.asarray(ctx_final), np.asarray(ref_ctx),
                               rtol=5e-3, atol=5e-3)

    print("KERNEL_OK")
</pallas_src>

<mosaic_0001>
module attributes {stable_mosaic.version = 11 : i64} {
  func.func @kernel(%arg0: i32, %arg1: memref<64x16xf32, #tpu.memory_space<vmem>>, %arg2: memref<8x32xf32, #tpu.memory_space<vmem>>, %arg3: memref<32x32xf32, #tpu.memory_space<vmem>>, %arg4: memref<16x32xf32, #tpu.memory_space<vmem>>, %arg5: memref<1x32xf32, #tpu.memory_space<vmem>>, %arg6: memref<16x32xf32, #tpu.memory_space<vmem>>, %arg7: memref<1x32xf32, #tpu.memory_space<vmem>>, %arg8: memref<32x32xf32, #tpu.memory_space<vmem>>, %arg9: memref<1x32xf32, #tpu.memory_space<vmem>>, %arg10: memref<32x256xf32, #tpu.memory_space<vmem>>, %arg11: memref<1x256xf32, #tpu.memory_space<vmem>>, %arg12: memref<256x8xf32, #tpu.memory_space<vmem>>, %arg13: memref<8x256xf32, #tpu.memory_space<vmem>>, %arg14: memref<32x256xf32, #tpu.memory_space<vmem>>, %arg15: memref<64x8xf32, #tpu.memory_space<vmem>>, %arg16: memref<8x32xf32, #tpu.memory_space<vmem>>, %arg17: memref<8x32xf32, #tpu.memory_space<vmem>>, %arg18: memref<64x32xf32, #tpu.memory_space<vmem>>, %arg19: memref<64x32xf32, #tpu.memory_space<vmem>>, %arg20: memref<64x32xf32, #tpu.memory_space<vmem>>) attributes {dimension_semantics = [#tpu.dimension_semantics<arbitrary>], iteration_bounds = array<i64: 1>, scalar_prefetch = 0 : i64, scratch_operands = 4 : i64, tpu.core_type = #tpu.core_type<tc>, window_params = [{transform_indices = @transform_0, window_bounds = array<i64: 64, 16>}, {pipeline_mode = #tpu.pipeline_mode<synchronous>, transform_indices = @transform_1, window_bounds = array<i64: 8, 32>}, {pipeline_mode = #tpu.pipeline_mode<synchronous>, transform_indices = @transform_2, window_bounds = array<i64: 32, 32>}, {pipeline_mode = #tpu.pipeline_mode<synchronous>, transform_indices = @transform_3, window_bounds = array<i64: 16, 32>}, {pipeline_mode = #tpu.pipeline_mode<synchronous>, transform_indices = @transform_4, window_bounds = array<i64: 1, 32>}, {pipeline_mode = #tpu.pipeline_mode<synchronous>, transform_indices = @transform_5, window_bounds = array<i64: 16, 32>}, {pipeline_mode = #tpu.pipeline_mode<synchronous>, transform_indices = @transform_6, window_bounds = array<i64: 1, 32>}, {pipeline_mode = #tpu.pipeline_mode<synchronous>, transform_indices = @transform_7, window_bounds = array<i64: 32, 32>}, {pipeline_mode = #tpu.pipeline_mode<synchronous>, transform_indices = @transform_8, window_bounds = array<i64: 1, 32>}, {pipeline_mode = #tpu.pipeline_mode<synchronous>, transform_indices = @transform_9, window_bounds = array<i64: 32, 256>}, {pipeline_mode = #tpu.pipeline_mode<synchronous>, transform_indices = @transform_10, window_bounds = array<i64: 1, 256>}, {pipeline_mode = #tpu.pipeline_mode<synchronous>, transform_indices = @transform_11, window_bounds = array<i64: 256, 8>}, {pipeline_mode = #tpu.pipeline_mode<synchronous>, transform_indices = @transform_12, window_bounds = array<i64: 8, 256>}, {pipeline_mode = #tpu.pipeline_mode<synchronous>, transform_indices = @transform_13, window_bounds = array<i64: 32, 256>}, {transform_indices = @transform_14, window_bounds = array<i64: 64, 8>}, {pipeline_mode = #tpu.pipeline_mode<synchronous>, transform_indices = @transform_15, window_bounds = array<i64: 8, 32>}]} {
    %c0_i32 = arith.constant 0 : i32
    %0 = arith.cmpi eq, %arg0, %c0_i32 : i32
    %1 = arith.extui %0 : i1 to i32
    %c0_i32_0 = arith.constant 0 : i32
    %2 = arith.cmpi ne, %1, %c0_i32_0 : i32
    scf.if %2 {
      %c0_59 = arith.constant 0 : index
      %c0_60 = arith.constant 0 : index
      %64 = vector.load %arg2[%c0_59, %c0_60] : memref<8x32xf32, #tpu.memory_space<vmem>>, vector<8x32xf32>
      %c0_61 = arith.constant 0 : index
      %c0_62 = arith.constant 0 : index
      %65 = vector.load %arg17[%c0_61, %c0_62] : memref<8x32xf32, #tpu.memory_space<vmem>>, vector<8x32xf32>
      tpu.vector_store %arg17[%c0_61, %c0_62], %64 {strides = array<i32>} : memref<8x32xf32, #tpu.memory_space<vmem>>, vector<8x32xf32>,
    } else {
    }
    %c0 = arith.constant 0 : index
    %c0_1 = arith.constant 0 : index
    %3 = vector.load %arg1[%c0, %c0_1] : memref<64x16xf32, #tpu.memory_space<vmem>>, vector<64x16xf32>
    %c0_2 = arith.constant 0 : index
    %c0_3 = arith.constant 0 : index
    %4 = vector.load %arg4[%c0_2, %c0_3] : memref<16x32xf32, #tpu.memory_space<vmem>>, vector<16x32xf32>
    %cst = arith.constant dense<0.000000e+00> : vector<64x32xf32>
    %5 = tpu.matmul %3, %4, %cst {dimension_numbers = #tpu.dot_dimension_numbers<[1], [0], [0], [1], [0, 0, 1, 1], [], []>} : vector<64x16xf32>, vector<16x32xf32>, vector<64x32xf32> -> vector<64x32xf32>
    %c0_4 = arith.constant 0 : index
    %c0_5 = arith.constant 0 : index
    %6 = vector.load %arg5[%c0_4, %c0_5] : memref<1x32xf32, #tpu.memory_space<vmem>>, vector<1x32xf32>
    %7 = vector.broadcast %6 : vector<1x32xf32> to vector<64x32xf32>
    %8 = arith.addf %5, %7 : vector<64x32xf32>
    %c0_6 = arith.constant 0 : index
    %c0_7 = arith.constant 0 : index
    %9 = vector.load %arg18[%c0_6, %c0_7] : memref<64x32xf32, #tpu.memory_space<vmem>>, vector<64x32xf32>
    tpu.vector_store %arg18[%c0_6, %c0_7], %8 {strides = array<i32>} : memref<64x32xf32, #tpu.memory_space<vmem>>, vector<64x32xf32>,
    %c0_8 = arith.constant 0 : index
    %c0_9 = arith.constant 0 : index
    %10 = vector.load %arg6[%c0_8, %c0_9] : memref<16x32xf32, #tpu.memory_space<vmem>>, vector<16x32xf32>
    %cst_10 = arith.constant dense<0.000000e+00> : vector<64x32xf32>
    %11 = tpu.matmul %3, %10, %cst_10 {dimension_numbers = #tpu.dot_dimension_numbers<[1], [0], [0], [1], [0, 0, 1, 1], [], []>} : vector<64x16xf32>, vector<16x32xf32>, vector<64x32xf32> -> vector<64x32xf32>
    %c0_11 = arith.constant 0 : index
    %c0_12 = arith.constant 0 : index
    %12 = vector.load %arg7[%c0_11, %c0_12] : memref<1x32xf32, #tpu.memory_space<vmem>>, vector<1x32xf32>
    %13 = vector.broadcast %12 : vector<1x32xf32> to vector<64x32xf32>
    %14 = arith.addf %11, %13 : vector<64x32xf32>
    %cst_13 = arith.constant 0.000000e+00 : f32
    %15 = vector.broadcast %cst_13 : f32 to vector<64x32xf32>
    %16 = arith.maximumf %14, %15 : vector<64x32xf32>
    %c0_14 = arith.constant 0 : index
    %c0_15 = arith.constant 0 : index
    %17 = vector.load %arg8[%c0_14, %c0_15] : memref<32x32xf32, #tpu.memory_space<vmem>>, vector<32x32xf32>
    %cst_16 = arith.constant dense<0.000000e+00> : vector<64x32xf32>
    %18 = tpu.matmul %16, %17, %cst_16 {dimension_numbers = #tpu.dot_dimension_numbers<[1], [0], [0], [1], [0, 0, 1, 1], [], []>} : vector<64x32xf32>, vector<32x32xf32>, vector<64x32xf32> -> vector<64x32xf32>
    %c0_17 = arith.constant 0 : index
    %c0_18 = arith.constant 0 : index
    %19 = vector.load %arg9[%c0_17, %c0_18] : memref<1x32xf32, #tpu.memory_space<vmem>>, vector<1x32xf32>
    %20 = vector.broadcast %19 : vector<1x32xf32> to vector<64x32xf32>
    %21 = arith.addf %18, %20 : vector<64x32xf32>
    %cst_19 = arith.constant 0.000000e+00 : f32
    %22 = vector.broadcast %cst_19 : f32 to vector<64x32xf32>
    %23 = arith.maximumf %21, %22 : vector<64x32xf32>
    %24 = arith.addf %23, %16 : vector<64x32xf32>
    %c0_20 = arith.constant 0 : index
    %c0_21 = arith.constant 0 : index
    %25 = vector.load %arg19[%c0_20, %c0_21] : memref<64x32xf32, #tpu.memory_space<vmem>>, vector<64x32xf32>
    tpu.vector_store %arg19[%c0_20, %c0_21], %24 {strides = array<i32>} : memref<64x32xf32, #tpu.memory_space<vmem>>, vector<64x32xf32>,
    %c0_22 = arith.constant 0 : index
    %c0_23 = arith.constant 0 : index
    %26 = vector.load %arg3[%c0_22, %c0_23] : memref<32x32xf32, #tpu.memory_space<vmem>>, vector<32x32xf32>
    %c8_i32 = arith.constant 8 : i32
    %27 = arith.muli %arg0, %c8_i32 : i32
    %c8_i32_24 = arith.constant 8 : i32
    %28 = arith.subi %c8_i32_24, %27 : i32
    %c8_i32_25 = arith.constant 8 : i32
    %29 = arith.minsi %c8_i32_25, %28 : i32
    %c0_26 = arith.constant 0 : index
    %c0_27 = arith.constant 0 : index
    %30 = vector.load %arg17[%c0_26, %c0_27] : memref<8x32xf32, #tpu.memory_space<vmem>>, vector<8x32xf32>
    %c0_i32_28 = arith.constant 0 : i32
    %31 = arith.subi %29, %c0_i32_28 : i32
    %32 = arith.addi %c0_i32_28, %31 : i32
    %c1_i32 = arith.constant 1 : i32
    %33 = scf.for %arg21 = %c0_i32_28 to %32 step %c1_i32 iter_args(%arg22 = %30) -> (vector<8x32xf32>)  : i32 {
      %c8_i32_59 = arith.constant 8 : i32
      %64 = arith.muli %arg21, %c8_i32_59 : i32
      %65 = tpu.assume_multiple %64, 8 : i32
      %66 = arith.index_cast %65 : i32 to index
      %c0_60 = arith.constant 0 : index
      %67 = vector.load %arg18[%66, %c0_60] : memref<64x32xf32, #tpu.memory_space<vmem>>, vector<8x32xf32>
      %68 = arith.index_cast %65 : i32 to index
      %c0_61 = arith.constant 0 : index
      %69 = vector.load %arg20[%68, %c0_61] : memref<64x32xf32, #tpu.memory_space<vmem>>, vector<8x32xf32>
      tpu.vector_store %arg20[%68, %c0_61], %arg22 {strides = array<i32>} : memref<64x32xf32, #tpu.memory_space<vmem>>, vector<8x32xf32>,
      %cst_62 = arith.constant dense<0.000000e+00> : vector<8x32xf32>
      %70 = tpu.matmul %arg22, %26, %cst_62 {dimension_numbers = #tpu.dot_dimension_numbers<[1], [0], [0], [1], [0, 0, 1, 1], [], []>} : vector<8x32xf32>, vector<32x32xf32>, vector<8x32xf32> -> vector<8x32xf32>
      %71 = arith.addf %70, %67 : vector<8x32xf32>
      %cst_63 = arith.constant 0.000000e+00 : f32
      %72 = vector.broadcast %cst_63 : f32 to vector<8x32xf32>
      %73 = arith.maximumf %71, %72 : vector<8x32xf32>
      %cst_64 = arith.constant 0.000000e+00 : f32
      %74 = vector.broadcast %cst_64 : f32 to vector<8x32xf32>
      %75 = arith.mulf %arg22, %74 : vector<8x32xf32>
      %cst_65 = arith.constant 1.000000e+00 : f32
      %76 = vector.broadcast %cst_65 : f32 to vector<8x32xf32>
      %77 = arith.mulf %73, %76 : vector<8x32xf32>
      %78 = arith.addf %75, %77 : vector<8x32xf32>
      scf.yield %78 : vector<8x32xf32>
    }
    %c0_29 = arith.constant 0 : index
    %c0_30 = arith.constant 0 : index
    %34 = vector.load %arg17[%c0_29, %c0_30] : memref<8x32xf32, #tpu.memory_space<vmem>>, vector<8x32xf32>
    tpu.vector_store %arg17[%c0_29, %c0_30], %33 {strides = array<i32>} : memref<8x32xf32, #tpu.memory_space<vmem>>, vector<8x32xf32>,
    %c0_31 = arith.constant 0 : index
    %c0_32 = arith.constant 0 : index
    %35 = vector.load %arg16[%c0_31, %c0_32] : memref<8x32xf32, #tpu.memory_space<vmem>>, vector<8x32xf32>
    tpu.vector_store %arg16[%c0_31, %c0_32], %33 {strides = array<i32>} : memref<8x32xf32, #tpu.memory_space<vmem>>, vector<8x32xf32>,
    %c0_33 = arith.constant 0 : index
    %c0_34 = arith.constant 0 : index
    %36 = vector.load %arg20[%c0_33, %c0_34] : memref<64x32xf32, #tpu.memory_space<vmem>>, vector<64x32xf32>
    %c0_35 = arith.constant 0 : index
    %c0_36 = arith.constant 0 : index
    %37 = vector.load %arg10[%c0_35, %c0_36] : memref<32x256xf32, #tpu.memory_space<vmem>>, vector<32x256xf32>
    %cst_37 = arith.constant dense<0.000000e+00> : vector<64x256xf32>
    %38 = tpu.matmul %36, %37, %cst_37 {dimension_numbers = #tpu.dot_dimension_numbers<[1], [0], [0], [1], [0, 0, 1, 1], [], []>} : vector<64x32xf32>, vector<32x256xf32>, vector<64x256xf32> -> vector<64x256xf32>
    %c0_38 = arith.constant 0 : index
    %c0_39 = arith.constant 0 : index
    %39 = vector.load %arg11[%c0_38, %c0_39] : memref<1x256xf32, #tpu.memory_space<vmem>>, vector<1x256xf32>
    %40 = vector.broadcast %39 : vector<1x256xf32> to vector<64x256xf32>
    %41 = arith.addf %38, %40 : vector<64x256xf32>
    %c0_40 = arith.constant 0 : index
    %c0_41 = arith.constant 0 : index
    %42 = vector.load %arg12[%c0_40, %c0_41] : memref<256x8xf32, #tpu.memory_space<vmem>>, vector<256x8xf32>
    %c0_42 = arith.constant 0 : index
    %c0_43 = arith.constant 0 : index
    %43 = vector.load %arg13[%c0_42, %c0_43] : memref<8x256xf32, #tpu.memory_space<vmem>>, vector<8x256xf32>
    %cst_44 = arith.constant dense<0.000000e+00> : vector<64x8xf32>
    %44 = tpu.matmul %41, %42, %cst_44 {dimension_numbers = #tpu.dot_dimension_numbers<[1], [0], [0], [1], [0, 0, 1, 1], [], []>} : vector<64x256xf32>, vector<256x8xf32>, vector<64x8xf32> -> vector<64x8xf32>
    %cst_45 = arith.constant 3.125000e-02 : f32
    %45 = vector.broadcast %cst_45 : f32 to vector<64x8xf32>
    %46 = arith.mulf %44, %45 : vector<64x8xf32>
    %cst_46 = arith.constant dense<0.000000e+00> : vector<64x256xf32>
    %47 = tpu.matmul %46, %43, %cst_46 {dimension_numbers = #tpu.dot_dimension_numbers<[1], [0], [0], [1], [0, 0, 1, 1], [], []>} : vector<64x8xf32>, vector<8x256xf32>, vector<64x256xf32> -> vector<64x256xf32>
    %48 = arith.subf %41, %47 : vector<64x256xf32>
    %49 = arith.mulf %48, %48 : vector<64x256xf32>
    %cst_47 = arith.constant dense<0.000000e+00> : vector<64x8xf32>
    %50 = tpu.matmul %49, %42, %cst_47 {dimension_numbers = #tpu.dot_dimension_numbers<[1], [0], [0], [1], [0, 0, 1, 1], [], []>} : vector<64x256xf32>, vector<256x8xf32>, vector<64x8xf32> -> vector<64x8xf32>
    %cst_48 = arith.constant 3.125000e-02 : f32
    %51 = vector.broadcast %cst_48 : f32 to vector<64x8xf32>
    %52 = arith.mulf %50, %51 : vector<64x8xf32>
    %cst_49 = arith.constant 9.99999974E-6 : f32
    %53 = vector.broadcast %cst_49 : f32 to vector<64x8xf32>
    %54 = arith.addf %52, %53 : vector<64x8xf32>
    %55 = math.rsqrt %54 : vector<64x8xf32>
    %cst_50 = arith.constant dense<0.000000e+00> : vector<64x256xf32>
    %56 = tpu.matmul %55, %43, %cst_50 {dimension_numbers = #tpu.dot_dimension_numbers<[1], [0], [0], [1], [0, 0, 1, 1], [], []>} : vector<64x8xf32>, vector<8x256xf32>, vector<64x256xf32> -> vector<64x256xf32>
    %57 = arith.mulf %48, %56 : vector<64x256xf32>
    %c0_51 = arith.constant 0 : index
    %c0_52 = arith.constant 0 : index
    %58 = vector.load %arg19[%c0_51, %c0_52] : memref<64x32xf32, #tpu.memory_space<vmem>>, vector<64x32xf32>
    %c0_53 = arith.constant 0 : index
    %c0_54 = arith.constant 0 : index
    %59 = vector.load %arg14[%c0_53, %c0_54] : memref<32x256xf32, #tpu.memory_space<vmem>>, vector<32x256xf32>
    %cst_55 = arith.constant dense<0.000000e+00> : vector<64x256xf32>
    %60 = tpu.matmul %58, %59, %cst_55 {dimension_numbers = #tpu.dot_dimension_numbers<[1], [0], [0], [1], [0, 0, 1, 1], [], []>} : vector<64x32xf32>, vector<32x256xf32>, vector<64x256xf32> -> vector<64x256xf32>
    %61 = arith.mulf %57, %60 : vector<64x256xf32>
    %cst_56 = arith.constant dense<0.000000e+00> : vector<64x8xf32>
    %62 = tpu.matmul %61, %42, %cst_56 {dimension_numbers = #tpu.dot_dimension_numbers<[1], [0], [0], [1], [0, 0, 1, 1], [], []>} : vector<64x256xf32>, vector<256x8xf32>, vector<64x8xf32> -> vector<64x8xf32>
    %c0_57 = arith.constant 0 : index
    %c0_58 = arith.constant 0 : index
    %63 = vector.load %arg15[%c0_57, %c0_58] : memref<64x8xf32, #tpu.memory_space<vmem>>, vector<64x8xf32>
    tpu.vector_store %arg15[%c0_57, %c0_58], %62 {strides = array<i32>} : memref<64x8xf32, #tpu.memory_space<vmem>>, vector<64x8xf32>,
    return
  }
  func.func @transform_0(%arg0: i32) -> (i32, i32) {
    %c0_i32 = arith.constant 0 : i32
    %c0_i32_0 = arith.constant 0 : i32
    return %arg0, %c0_i32 : i32, i32
  }
  func.func @transform_1(%arg0: i32) -> (i32, i32) {
    %c0_i32 = arith.constant 0 : i32
    %c0_i32_0 = arith.constant 0 : i32
    %c0_i32_1 = arith.constant 0 : i32
    return %c0_i32, %c0_i32_0 : i32, i32
  }
  func.func @transform_2(%arg0: i32) -> (i32, i32) {
    %c0_i32 = arith.constant 0 : i32
    %c0_i32_0 = arith.constant 0 : i32
    %c0_i32_1 = arith.constant 0 : i32
    return %c0_i32, %c0_i32_0 : i32, i32
  }
  func.func @transform_3(%arg0: i32) -> (i32, i32) {
    %c0_i32 = arith.constant 0 : i32
    %c0_i32_0 = arith.constant 0 : i32
    %c0_i32_1 = arith.constant 0 : i32
    return %c0_i32, %c0_i32_0 : i32, i32
  }
  func.func @transform_4(%arg0: i32) -> (i32, i32) {
    %c0_i32 = arith.constant 0 : i32
    %c0_i32_0 = arith.constant 0 : i32
    %c0_i32_1 = arith.constant 0 : i32
    return %c0_i32, %c0_i32_0 : i32, i32
  }
  func.func @transform_5(%arg0: i32) -> (i32, i32) {
    %c0_i32 = arith.constant 0 : i32
    %c0_i32_0 = arith.constant 0 : i32
    %c0_i32_1 = arith.constant 0 : i32
    return %c0_i32, %c0_i32_0 : i32, i32
  }
  func.func @transform_6(%arg0: i32) -> (i32, i32) {
    %c0_i32 = arith.constant 0 : i32
    %c0_i32_0 = arith.constant 0 : i32
    %c0_i32_1 = arith.constant 0 : i32
    return %c0_i32, %c0_i32_0 : i32, i32
  }
  func.func @transform_7(%arg0: i32) -> (i32, i32) {
    %c0_i32 = arith.constant 0 : i32
    %c0_i32_0 = arith.constant 0 : i32
    %c0_i32_1 = arith.constant 0 : i32
    return %c0_i32, %c0_i32_0 : i32, i32
  }
  func.func @transform_8(%arg0: i32) -> (i32, i32) {
    %c0_i32 = arith.constant 0 : i32
    %c0_i32_0 = arith.constant 0 : i32
    %c0_i32_1 = arith.constant 0 : i32
    return %c0_i32, %c0_i32_0 : i32, i32
  }
  func.func @transform_9(%arg0: i32) -> (i32, i32) {
    %c0_i32 = arith.constant 0 : i32
    %c0_i32_0 = arith.constant 0 : i32
    %c0_i32_1 = arith.constant 0 : i32
    return %c0_i32, %c0_i32_0 : i32, i32
  }
  func.func @transform_10(%arg0: i32) -> (i32, i32) {
    %c0_i32 = arith.constant 0 : i32
    %c0_i32_0 = arith.constant 0 : i32
    %c0_i32_1 = arith.constant 0 : i32
    return %c0_i32, %c0_i32_0 : i32, i32
  }
  func.func @transform_11(%arg0: i32) -> (i32, i32) {
    %c0_i32 = arith.constant 0 : i32
    %c0_i32_0 = arith.constant 0 : i32
    %c0_i32_1 = arith.constant 0 : i32
    return %c0_i32, %c0_i32_0 : i32, i32
  }
  func.func @transform_12(%arg0: i32) -> (i32, i32) {
    %c0_i32 = arith.constant 0 : i32
    %c0_i32_0 = arith.constant 0 : i32
    %c0_i32_1 = arith.constant 0 : i32
    return %c0_i32, %c0_i32_0 : i32, i32
  }
  func.func @transform_13(%arg0: i32) -> (i32, i32) {
    %c0_i32 = arith.constant 0 : i32
    %c0_i32_0 = arith.constant 0 : i32
    %c0_i32_1 = arith.constant 0 : i32
    return %c0_i32, %c0_i32_0 : i32, i32
  }
  func.func @transform_14(%arg0: i32) -> (i32, i32) {
    %c0_i32 = arith.constant 0 : i32
    %c0_i32_0 = arith.constant 0 : i32
    return %arg0, %c0_i32 : i32, i32
  }
  func.func @transform_15(%arg0: i32) -> (i32, i32) {
    %c0_i32 = arith.constant 0 : i32
    %c0_i32_0 = arith.constant 0 : i32
    %c0_i32_1 = arith.constant 0 : i32
    return %c0_i32, %c0_i32_0 : i32, i32
  }
}

</mosaic_0001>

<llo_original>
// kernel: tpu_custom_call.1
$region0: #{tpu_custom_call.1}
  #allocation0 [shape = 'u32[]', space=smem, size = 0x4, offset = 0x4, fixed_abs, tag = 'smem constant byte address 0x4 - core index']
  #allocation1 [shape = 'u32[144,128]{1,0:T(1,128)}', space=vmem, size = 0x12000, scoped, tag = 'internal scratch']
  #allocation2 [shape = 'f32[8,32]{1,0:T(8,128)}', space=vmem, size = 0x1000, scoped, tag = 'scratch operand']
  #allocation3 [shape = 'f32[64,32]{1,0:T(8,128)}', space=vmem, size = 0x8000, scoped, tag = 'scratch operand']
  #allocation4 [shape = 'f32[64,32]{1,0:T(8,128)}', space=vmem, size = 0x8000, scoped, tag = 'scratch operand']
  #allocation5 [shape = 'f32[64,32]{1,0:T(8,128)}', space=vmem, size = 0x8000, scoped, tag = 'scratch operand']
  %s0 = inlined_call_operand.vmem [shape: f32[64,16], index: 0, kind: input, shape index: {}]
  %s1 = inlined_call_operand.vmem [shape: f32[8,32], index: 1, kind: input, shape index: {}]
  %s2 = inlined_call_operand.vmem [shape: f32[32,32], index: 2, kind: input, shape index: {}]
  %s3 = inlined_call_operand.vmem [shape: f32[16,32], index: 3, kind: input, shape index: {}]
  %s4 = inlined_call_operand.vmem [shape: f32[1,32], index: 4, kind: input, shape index: {}]
  %s5 = inlined_call_operand.vmem [shape: f32[16,32], index: 5, kind: input, shape index: {}]
  %s6 = inlined_call_operand.vmem [shape: f32[1,32], index: 6, kind: input, shape index: {}]
  %s7 = inlined_call_operand.vmem [shape: f32[32,32], index: 7, kind: input, shape index: {}]
  %s8 = inlined_call_operand.vmem [shape: f32[1,32], index: 8, kind: input, shape index: {}]
  %s9 = inlined_call_operand.vmem [shape: f32[32,256], index: 9, kind: input, shape index: {}]
  %s10 = inlined_call_operand.vmem [shape: f32[1,256], index: 10, kind: input, shape index: {}]
  %s11 = inlined_call_operand.vmem [shape: f32[256,8], index: 11, kind: input, shape index: {}]
  %s12 = inlined_call_operand.vmem [shape: f32[8,256], index: 12, kind: input, shape index: {}]
  %s13 = inlined_call_operand.vmem [shape: f32[32,256], index: 13, kind: input, shape index: {}]
  %s14 = inlined_call_operand.vmem [shape: f32[64,8], index: 14, kind: output, shape index: {0}]
  %s15 = inlined_call_operand.hbm [shape: f32[8,32], index: 15, kind: output, shape index: {1}]
  %16 = xla_tuple %s14, %s15
  %s17 = sld [smem:[#allocation0]]
  $region85: #{tpu_custom_call.1} parent=0
    _
  %s19 = ssub.s32 1, %s17
  %s20 = scalar_select 0, %s19, %s17
  $region1: #{tpu_custom_call.1} parent=0
    #allocation6 [shape = 'u8[4096]{0}', space=vmem, size = 0x1000, scoped, tag = 'output window, operand 1, single buffered']
    #allocation7 [shape = 's32[1]{0}', space=sflag, size = 0x4, scoped, tag = 'scoped memory for tpu_custom_call.1']
    %21 = vsyncpa [#allocation7], 0
    // Predicated region
    $region2: #{tpu_custom_call.1} parent=1 // pred_check
      _
    $region3: #{tpu_custom_call.1} parent=1 // pred_check_branch
      %23 = sbr.rel (0) target = $region5
    $region4: #{tpu_custom_call.1} parent=1 // pred_region
      _
    $region5: #{tpu_custom_call.1} parent=1 // pred_fallthru
      _
    // Predicated region
    $region6: #{tpu_custom_call.1} parent=1 // pred_check
      _
    $region7: #{tpu_custom_call.1} parent=1 // pred_check_branch
      %25 = sbr.rel (0) target = $region9
    $region8: #{tpu_custom_call.1} parent=1 // pred_region
      _
    $region9: #{tpu_custom_call.1} parent=1 // pred_fallthru
      _
    // Predicated region
    $region10: #{tpu_custom_call.1} parent=1 // pred_check
      _
    $region11: #{tpu_custom_call.1} parent=1 // pred_check_branch
      %27 = sbr.rel (0) target = $region13
    $region12: #{tpu_custom_call.1} parent=1 // pred_region
      _
    $region13: #{tpu_custom_call.1} parent=1 // pred_fallthru
      _
    // Predicated region
    $region14: #{tpu_custom_call.1} parent=1 // pred_check
      _
    $region15: #{tpu_custom_call.1} parent=1 // pred_check_branch
      %29 = sbr.rel (0) target = $region17
    $region16: #{tpu_custom_call.1} parent=1 // pred_region
      _
    $region17: #{tpu_custom_call.1} parent=1 // pred_fallthru
      _
    // Predicated region
    $region18: #{tpu_custom_call.1} parent=1 // pred_check
      _
    $region19: #{tpu_custom_call.1} parent=1 // pred_check_branch
      %31 = sbr.rel (0) target = $region21
    $region20: #{tpu_custom_call.1} parent=1 // pred_region
      _
    $region21: #{tpu_custom_call.1} parent=1 // pred_fallthru
      _
    // Predicated region
    $region22: #{tpu_custom_call.1} parent=1 // pred_check
      _
    $region23: #{tpu_custom_call.1} parent=1 // pred_check_branch
      %33 = sbr.rel (0) target = $region25
    $region24: #{tpu_custom_call.1} parent=1 // pred_region
      _
    $region25: #{tpu_custom_call.1} parent=1 // pred_fallthru
      _
    // Predicated region
    $region26: #{tpu_custom_call.1} parent=1 // pred_check
      _
    $region27: #{tpu_custom_call.1} parent=1 // pred_check_branch
      %35 = sbr.rel (0) target = $region29
    $region28: #{tpu_custom_call.1} parent=1 // pred_region
      _
    $region29: #{tpu_custom_call.1} parent=1 // pred_fallthru
      _
    // Predicated region
    $region30: #{tpu_custom_call.1} parent=1 // pred_check
      _
    $region31: #{tpu_custom_call.1} parent=1 // pred_check_branch
      %37 = sbr.rel (0) target = $region33
    $region32: #{tpu_custom_call.1} parent=1 // pred_region
      _
    $region33: #{tpu_custom_call.1} parent=1 // pred_fallthru
      _
    // Predicated region
    $region34: #{tpu_custom_call.1} parent=1 // pred_check
      _
    $region35: #{tpu_custom_call.1} parent=1 // pred_check_branch
      %39 = sbr.rel (0) target = $region37
    $region36: #{tpu_custom_call.1} parent=1 // pred_region
      _
    $region37: #{tpu_custom_call.1} parent=1 // pred_fallthru
      _
    // Predicated region
    $region38: #{tpu_custom_call.1} parent=1 // pred_check
      _
    $region39: #{tpu_custom_call.1} parent=1 // pred_check_branch
      %41 = sbr.rel (0) target = $region41
    $region40: #{tpu_custom_call.1} parent=1 // pred_region
      _
    $region41: #{tpu_custom_call.1} parent=1 // pred_fallthru
      _
    // Predicated region
    $region42: #{tpu_custom_call.1} parent=1 // pred_check
      _
    $region43: #{tpu_custom_call.1} parent=1 // pred_check_branch
      %43 = sbr.rel (0) target = $region45
    $region44: #{tpu_custom_call.1} parent=1 // pred_region
      _
    $region45: #{tpu_custom_call.1} parent=1 // pred_fallthru
      _
    // Predicated region
    $region46: #{tpu_custom_call.1} parent=1 // pred_check
      _
    $region47: #{tpu_custom_call.1} parent=1 // pred_check_branch
      %45 = sbr.rel (0) target = $region49
    $region48: #{tpu_custom_call.1} parent=1 // pred_region
      _
    $region49: #{tpu_custom_call.1} parent=1 // pred_fallthru
      _
    // Predicated region
    $region50: #{tpu_custom_call.1} parent=1 // pred_check
      _
    $region51: #{tpu_custom_call.1} parent=1 // pred_check_branch
      %47 = sbr.rel (0) target = $region53
    $region52: #{tpu_custom_call.1} parent=1 // pred_region
      _
    $region53: #{tpu_custom_call.1} parent=1 // pred_fallthru
      _
    // Predicated region
    $region54: #{tpu_custom_call.1} parent=1 // pred_check
      _
    $region55: #{tpu_custom_call.1} parent=1 // pred_check_branch
      %49 = sbr.rel (0) target = $region57
    $region56: #{tpu_custom_call.1} parent=1 // pred_region
      _
    $region57: #{tpu_custom_call.1} parent=1 // pred_fallthru
      _
    %p50 = scmp.eq.s32.totalorder 0, 0
    // Predicated region
    $region58: #{tpu_custom_call.1} parent=1 // pred_check
      %p51 = pneg %p50
    $region59: #{tpu_custom_call.1} parent=1 // pred_check_branch
      %53 = sbr.rel (%p51) target = $region61
    $region60: #{tpu_custom_call.1} parent=1 // pred_region
      %v54 = vld [vmem:[%s1] sm:$0xff]
      %vm55 = vcmask 261120
      %56 = vst.msk [vmem:[#allocation2] sm:$0xff] %vm55, %v54
    $region61: #{tpu_custom_call.1} parent=1 // pred_fallthru
      _
    %v57 = vld [vmem:[%s0] sm:$0xff]
    %v58 = vld [vmem:[%s0 + $0x8] sm:$0xff]
    %v59 = vld [vmem:[%s0 + $0x10] sm:$0xff]
    %v60 = vld [vmem:[%s0 + $0x18] sm:$0xff]
    %v61 = vld [vmem:[%s0 + $0x20] sm:$0xff]
    %v62 = vld [vmem:[%s0 + $0x28] sm:$0xff]
    %v63 = vld [vmem:[%s0 + $0x30] sm:$0xff]
    %v64 = vld [vmem:[%s0 + $0x38] sm:$0xff]
    %v65 = vld [vmem:[%s3] sm:$0xff]
    %v66 = vld [vmem:[%s3 + $0x8] sm:$0xff]
    %v67 = vld [vmem:[%s4] sm:$0x1]
    %v69 = vlaneseq
    %v70 = vshrl.u32 %v69, 7
    %v71 = vsub.s32 0, %v70
    %v72 = vrot.slane %v67, %v71
    %vm74 = vcmask 130048
    %v76 = vsel %vm74, %v57, 0
    %v79 = vsel %vm74, %v58, 0
    %v82 = vsel %vm74, %v59, 0
    %v85 = vsel %vm74, %v60, 0
    %v88 = vsel %vm74, %v61, 0
    %v91 = vsel %vm74, %v62, 0
    %v94 = vsel %vm74, %v63, 0
    %v97 = vsel %vm74, %v64, 0
    %99 = vmatprep.subr.mxu0 0.0
    %100 = vmatpush1.msra.mxu0 %v65
    %101 = vmatprep.subr.mxu0 0.0
    %102 = vmatpush1.msra.mxu0 %v66
    %103 = vmatprep.subr.mxu0 0.0
    %104 = vmatpush1.msra.mxu0 0.0
    %105 = vmatprep.subr.mxu0 0.0
    %106 = vmatpush1.msra.mxu0 0.0
    %107 = vmatprep.subr.mxu0 0.0
    %108 = vmatpush1.msra.mxu0 0.0
    %109 = vmatprep.subr.mxu0 0.0
    %110 = vmatpush1.msra.mxu0 0.0
    %111 = vmatprep.subr.mxu0 0.0
    %112 = vmatpush1.msra.mxu0 0.0
    %113 = vmatprep.subr.mxu0 0.0
    %114 = vmatpush1.msra.mxu0 0.0
    %115 = vmatprep.subr.mxu0 0.0
    %116 = vmatpush1.msra.mxu0 0.0
    %117 = vmatprep.subr.mxu0 0.0
    %118 = vmatpush1.msra.mxu0 0.0
    %119 = vmatprep.subr.mxu0 0.0
    %120 = vmatpush1.msra.mxu0 0.0
    %121 = vmatprep.subr.mxu0 0.0
    %122 = vmatpush1.msra.mxu0 0.0
    %123 = vmatprep.subr.mxu0 0.0
    %124 = vmatpush1.msra.mxu0 0.0
    %125 = vmatprep.subr.mxu0 0.0
    %126 = vmatpush1.msra.mxu0 0.0
    %127 = vmatprep.subr.mxu0 0.0
    %128 = vmatpush1.msra.mxu0 0.0
    %129 = vmatprep.subr.mxu0 0.0
    %130 = vmatpush1.msra.mxu0 0.0
    %131 = vmatprep.subr.mxu0 0.0
    %132 = vmatpush1.msra.mxu0 0.0
    %133 = vmatprep.subr.mxu0 0.0
    %134 = vmatpush1.msra.mxu0 0.0
    %135 = vmatprep.subr.mxu0 0.0
    %136 = vmatpush1.msra.mxu0 0.0
    %137 = vmatprep.subr.mxu0 0.0
    %138 = vmatpush1.msra.mxu0 0.0
    %139 = vmatprep.subr.mxu0 0.0
    %140 = vmatpush1.msra.mxu0 0.0
    %141 = vmatprep.subr.mxu0 0.0
    %142 = vmatpush1.msra.mxu0 0.0
    %143 = vmatprep.subr.mxu0 0.0
    %144 = vmatpush1.msra.mxu0 0.0
    %145 = vmatprep.subr.mxu0 0.0
    %146 = vmatpush1.msra.mxu0 0.0
    %147 = vmatprep.subr.mxu0 0.0
    %148 = vmatpush1.msra.mxu0 0.0
    %149 = vmatprep.subr.mxu0 0.0
    %150 = vmatpush1.msra.mxu0 0.0
    %151 = vmatprep.subr.mxu0 0.0
    %152 = vmatpush1.msra.mxu0 0.0
    %153 = vmatprep.subr.mxu0 0.0
    %154 = vmatpush1.msra.mxu0 0.0
    %155 = vmatprep.subr.mxu0 0.0
    %156 = vmatpush1.msra.mxu0 0.0
    %157 = vmatprep.subr.mxu0 0.0
    %158 = vmatpush1.msra.mxu0 0.0
    %159 = vmatprep.subr.mxu0 0.0
    %160 = vmatpush1.msra.mxu0 0.0
    %161 = vmatprep.subr.mxu0 0.0
    %162 = vmatpush1.msra.mxu0 0.0
    %163 = vmatprep.mubr.f32.mxu0 0.0
    %164 = vmatmul.mubr.f32.gmra.mrb[0].mxu0 %v76
    %v165 = vpop.f32.mrb[0].mxu0
    %v166 = vadd.f32 %v72, %v165
    %v167 = vpop.f32.mrb[0].mxu0
    %168 = vmatprep.mubr.f32.mxu0 0.0
    %169 = vmatmul.mubr.f32.gmra.mrb[0].mxu0 %v79
    %v170 = vpop.f32.mrb[0].mxu0
    %v171 = vadd.f32 %v72, %v170
    %v172 = vpop.f32.mrb[0].mxu0
    %173 = vmatprep.mubr.f32.mxu0 0.0
    %174 = vmatmul.mubr.f32.gmra.mrb[0].mxu0 %v82
    %v175 = vpop.f32.mrb[0].mxu0
    %v176 = vadd.f32 %v72, %v175
    %v177 = vpop.f32.mrb[0].mxu0
    %178 = vmatprep.mubr.f32.mxu0 0.0
    %179 = vmatmul.mubr.f32.gmra.mrb[0].mxu0 %v85
    %v180 = vpop.f32.mrb[0].mxu0
    %v181 = vadd.f32 %v72, %v180
    %v182 = vpop.f32.mrb[0].mxu0
    %183 = vmatprep.mubr.f32.mxu0 0.0
    %184 = vmatmul.mubr.f32.gmra.mrb[0].mxu0 %v88
    %v185 = vpop.f32.mrb[0].mxu0
    %v186 = vadd.f32 %v72, %v185
    %v187 = vpop.f32.mrb[0].mxu0
    %188 = vmatprep.mubr.f32.mxu0 0.0
    %189 = vmatmul.mubr.f32.gmra.mrb[0].mxu0 %v91
    %v190 = vpop.f32.mrb[0].mxu0
    %v191 = vadd.f32 %v72, %v190
    %v192 = vpop.f32.mrb[0].mxu0
    %193 = vmatprep.mubr.f32.mxu0 0.0
    %194 = vmatmul.mubr.f32.gmra.mrb[0].mxu0 %v94
    %v195 = vpop.f32.mrb[0].mxu0
    %v196 = vadd.f32 %v72, %v195
    %v197 = vpop.f32.mrb[0].mxu0
    %198 = vmatprep.mubr.f32.mxu0 0.0
    %199 = vmatmul.mubr.f32.gmra.mrb[0].mxu0 %v97
    %v200 = vpop.f32.mrb[0].mxu0
    %v201 = vadd.f32 %v72, %v200
    %v202 = vpop.f32.mrb[0].mxu0
    %203 = vdwg.mxu0
    %vm204 = vcmask 261120
    %205 = vst.msk [vmem:[#allocation3] sm:$0xff] %vm204, %v166
    %206 = vst.msk [vmem:[#allocation3 + $0x8] sm:$0xff] %vm204, %v171
    %207 = vst.msk [vmem:[#allocation3 + $0x10] sm:$0xff] %vm204, %v176
    %208 = vst.msk [vmem:[#allocation3 + $0x18] sm:$0xff] %vm204, %v181
    %209 = vst.msk [vmem:[#allocation3 + $0x20] sm:$0xff] %vm204, %v186
    %210 = vst.msk [vmem:[#allocation3 + $0x28] sm:$0xff] %vm204, %v191
    %211 = vst.msk [vmem:[#allocation3 + $0x30] sm:$0xff] %vm204, %v196
    %212 = vst.msk [vmem:[#allocation3 + $0x38] sm:$0xff] %vm204, %v201
    %v213 = vld [vmem:[%s5] sm:$0xff]
    %v214 = vld [vmem:[%s5 + $0x8] sm:$0xff]
    %v215 = vld [vmem:[%s6] sm:$0x1]
    %v217 = vlaneseq
    %v218 = vshrl.u32 %v217, 7
    %v219 = vsub.s32 0, %v218
    %v220 = vrot.slane %v215, %v219
    %222 = vmatprep.subr.mxu0 0.0
    %223 = vmatpush1.msra.mxu0 %v213
    %224 = vmatprep.subr.mxu0 0.0
    %225 = vmatpush1.msra.mxu0 %v214
    %226 = vmatprep.subr.mxu0 0.0
    %227 = vmatpush1.msra.mxu0 0.0
    %228 = vmatprep.subr.mxu0 0.0
    %229 = vmatpush1.msra.mxu0 0.0
    %230 = vmatprep.subr.mxu0 0.0
    %231 = vmatpush1.msra.mxu0 0.0
    %232 = vmatprep.subr.mxu0 0.0
    %233 = vmatpush1.msra.mxu0 0.0
    %234 = vmatprep.subr.mxu0 0.0
    %235 = vmatpush1.msra.mxu0 0.0
    %236 = vmatprep.subr.mxu0 0.0
    %237 = vmatpush1.msra.mxu0 0.0
    %238 = vmatprep.subr.mxu0 0.0
    %239 = vmatpush1.msra.mxu0 0.0
    %240 = vmatprep.subr.mxu0 0.0
    %241 = vmatpush1.msra.mxu0 0.0
    %242 = vmatprep.subr.mxu0 0.0
    %243 = vmatpush1.msra.mxu0 0.0
    %244 = vmatprep.subr.mxu0 0.0
    %245 = vmatpush1.msra.mxu0 0.0
    %246 = vmatprep.subr.mxu0 0.0
    %247 = vmatpush1.msra.mxu0 0.0
    %248 = vmatprep.subr.mxu0 0.0
    %249 = vmatpush1.msra.mxu0 0.0
    %250 = vmatprep.subr.mxu0 0.0
    %251 = vmatpush1.msra.mxu0 0.0
    %252 = vmatprep.subr.mxu0 0.0
    %253 = vmatpush1.msra.mxu0 0.0
    %254 = vmatprep.subr.mxu0 0.0
    %255 = vmatpush1.msra.mxu0 0.0
    %256 = vmatprep.subr.mxu0 0.0
    %257 = vmatpush1.msra.mxu0 0.0
    %258 = vmatprep.subr.mxu0 0.0
    %259 = vmatpush1.msra.mxu0 0.0
    %260 = vmatprep.subr.mxu0 0.0
    %261 = vmatpush1.msra.mxu0 0.0
    %262 = vmatprep.subr.mxu0 0.0
    %263 = vmatpush1.msra.mxu0 0.0
    %264 = vmatprep.subr.mxu0 0.0
    %265 = vmatpush1.msra.mxu0 0.0
    %266 = vmatprep.subr.mxu0 0.0
    %267 = vmatpush1.msra.mxu0 0.0
    %268 = vmatprep.subr.mxu0 0.0
    %269 = vmatpush1.msra.mxu0 0.0
    %270 = vmatprep.subr.mxu0 0.0
    %271 = vmatpush1.msra.mxu0 0.0
    %272 = vmatprep.subr.mxu0 0.0
    %273 = vmatpush1.msra.mxu0 0.0
    %274 = vmatprep.subr.mxu0 0.0
    %275 = vmatpush1.msra.mxu0 0.0
    %276 = vmatprep.subr.mxu0 0.0
    %277 = vmatpush1.msra.mxu0 0.0
    %278 = vmatprep.subr.mxu0 0.0
    %279 = vmatpush1.msra.mxu0 0.0
    %280 = vmatprep.subr.mxu0 0.0
    %281 = vmatpush1.msra.mxu0 0.0
    %282 = vmatprep.subr.mxu0 0.0
    %283 = vmatpush1.msra.mxu0 0.0
    %284 = vmatprep.subr.mxu0 0.0
    %285 = vmatpush1.msra.mxu0 0.0
    %286 = vmatprep.mubr.f32.mxu0 0.0
    %287 = vmatmul.mubr.f32.gmra.mrb[0].mxu0 %v76
    %v288 = vpop.f32.mrb[0].mxu0
    %v289 = vadd.f32 %v220, %v288
    %v290 = vpop.f32.mrb[0].mxu0
    %291 = vmatprep.mubr.f32.mxu0 0.0
    %292 = vmatmul.mubr.f32.gmra.mrb[0].mxu0 %v79
    %v293 = vpop.f32.mrb[0].mxu0
    %v294 = vadd.f32 %v220, %v293
    %v295 = vpop.f32.mrb[0].mxu0
    %296 = vmatprep.mubr.f32.mxu0 0.0
    %297 = vmatmul.mubr.f32.gmra.mrb[0].mxu0 %v82
    %v298 = vpop.f32.mrb[0].mxu0
    %v299 = vadd.f32 %v220, %v298
    %v300 = vpop.f32.mrb[0].mxu0
    %301 = vmatprep.mubr.f32.mxu0 0.0
    %302 = vmatmul.mubr.f32.gmra.mrb[0].mxu0 %v85
    %v303 = vpop.f32.mrb[0].mxu0
    %v304 = vadd.f32 %v220, %v303
    %v305 = vpop.f32.mrb[0].mxu0
    %306 = vmatprep.mubr.f32.mxu0 0.0
    %307 = vmatmul.mubr.f32.gmra.mrb[0].mxu0 %v88
    %v308 = vpop.f32.mrb[0].mxu0
    %v309 = vadd.f32 %v220, %v308
    %v310 = vpop.f32.mrb[0].mxu0
    %311 = vmatprep.mubr.f32.mxu0 0.0
    %312 = vmatmul.mubr.f32.gmra.mrb[0].mxu0 %v91
    %v313 = vpop.f32.mrb[0].mxu0
    %v314 = vadd.f32 %v220, %v313
    %v315 = vpop.f32.mrb[0].mxu0
    %316 = vmatprep.mubr.f32.mxu0 0.0
    %317 = vmatmul.mubr.f32.gmra.mrb[0].mxu0 %v94
    %v318 = vpop.f32.mrb[0].mxu0
    %v319 = vadd.f32 %v220, %v318
    %v320 = vpop.f32.mrb[0].mxu0
    %321 = vmatprep.mubr.f32.mxu0 0.0
    %322 = vmatmul.mubr.f32.gmra.mrb[0].mxu0 %v97
    %v323 = vpop.f32.mrb[0].mxu0
    %v324 = vadd.f32 %v220, %v323
    %v325 = vpop.f32.mrb[0].mxu0
    %326 = vdwg.mxu0
    %v327 = vmax.f32 %v289, 0.0
    %v328 = vmax.f32 %v294, 0.0
    %v329 = vmax.f32 %v299, 0.0
    %v330 = vmax.f32 %v304, 0.0
    %v331 = vmax.f32 %v309, 0.0
    %v332 = vmax.f32 %v314, 0.0
    %v333 = vmax.f32 %v319, 0.0
    %v334 = vmax.f32 %v324, 0.0
    %v335 = vld [vmem:[%s7] sm:$0xff]
    %v336 = vld [vmem:[%s7 + $0x8] sm:$0xff]
    %v337 = vld [vmem:[%s7 + $0x10] sm:$0xff]
    %v338 = vld [vmem:[%s7 + $0x18] sm:$0xff]
    %v339 = vld [vmem:[%s8] sm:$0x1]
    %v341 = vlaneseq
    %v342 = vshrl.u32 %v341, 7
    %v343 = vsub.s32 0, %v342
    %v344 = vrot.slane %v339, %v343
    %v347 = vsel %vm204, %v327, 0
    %v350 = vsel %vm204, %v328, 0
    %v353 = vsel %vm204, %v329, 0
    %v356 = vsel %vm204, %v330, 0
    %v359 = vsel %vm204, %v331, 0
    %v362 = vsel %vm204, %v332, 0
    %v365 = vsel %vm204, %v333, 0
    %v368 = vsel %vm204, %v334, 0
    %370 = vmatprep.subr.mxu0 0.0
    %371 = vmatpush1.msra.mxu0 %v335
    %372 = vmatprep.subr.mxu0 0.0
    %373 = vmatpush1.msra.mxu0 %v336
    %374 = vmatprep.subr.mxu0 0.0
    %375 = vmatpush1.msra.mxu0 %v337
    %376 = vmatprep.subr.mxu0 0.0
    %377 = vmatpush1.msra.mxu0 %v338
    %378 = vmatprep.subr.mxu0 0.0
    %379 = vmatpush1.msra.mxu0 0.0
    %380 = vmatprep.subr.mxu0 0.0
    %381 = vmatpush1.msra.mxu0 0.0
    %382 = vmatprep.subr.mxu0 0.0
    %383 = vmatpush1.msra.mxu0 0.0
    %384 = vmatprep.subr.mxu0 0.0
    %385 = vmatpush1.msra.mxu0 0.0
    %386 = vmatprep.subr.mxu0 0.0
    %387 = vmatpush1.msra.mxu0 0.0
    %388 = vmatprep.subr.mxu0 0.0
    %389 = vmatpush1.msra.mxu0 0.0
    %390 = vmatprep.subr.mxu0 0.0
    %391 = vmatpush1.msra.mxu0 0.0
    %392 = vmatprep.subr.mxu0 0.0
    %393 = vmatpush1.msra.mxu0 0.0
    %394 = vmatprep.subr.mxu0 0.0
    %395 = vmatpush1.msra.mxu0 0.0
    %396 = vmatprep.subr.mxu0 0.0
    %397 = vmatpush1.msra.mxu0 0.0
    %398 = vmatprep.subr.mxu0 0.0
    %399 = vmatpush1.msra.mxu0 0.0
    %400 = vmatprep.subr.mxu0 0.0
    %401 = vmatpush1.msra.mxu0 0.0
    %402 = vmatprep.subr.mxu0 0.0
    %403 = vmatpush1.msra.mxu0 0.0
    %404 = vmatprep.subr.mxu0 0.0
    %405 = vmatpush1.msra.mxu0 0.0
    %406 = vmatprep.subr.mxu0 0.0
    %407 = vmatpush1.msra.mxu0 0.0
    %408 = vmatprep.subr.mxu0 0.0
    %409 = vmatpush1.msra.mxu0 0.0
    %410 = vmatprep.subr.mxu0 0.0
    %411 = vmatpush1.msra.mxu0 0.0
    %412 = vmatprep.subr.mxu0 0.0
    %413 = vmatpush1.msra.mxu0 0.0
    %414 = vmatprep.subr.mxu0 0.0
    %415 = vmatpush1.msra.mxu0 0.0
    %416 = vmatprep.subr.mxu0 0.0
    %417 = vmatpush1.msra.mxu0 0.0
    %418 = vmatprep.subr.mxu0 0.0
    %419 = vmatpush1.msra.mxu0 0.0
    %420 = vmatprep.subr.mxu0 0.0
    %421 = vmatpush1.msra.mxu0 0.0
    %422 = vmatprep.subr.mxu0 0.0
    %423 = vmatpush1.msra.mxu0 0.0
    %424 = vmatprep.subr.mxu0 0.0
    %425 = vmatpush1.msra.mxu0 0.0
    %426 = vmatprep.subr.mxu0 0.0
    %427 = vmatpush1.msra.mxu0 0.0
    %428 = vmatprep.subr.mxu0 0.0
    %429 = vmatpush1.msra.mxu0 0.0
    %430 = vmatprep.subr.mxu0 0.0
    %431 = vmatpush1.msra.mxu0 0.0
    %432 = vmatprep.subr.mxu0 0.0
    %433 = vmatpush1.msra.mxu0 0.0
    %434 = vmatprep.mubr.f32.mxu0 0.0
    %435 = vmatmul.mubr.f32.gmra.mrb[0].mxu0 %v347
    %v436 = vpop.f32.mrb[0].mxu0
    %v437 = vadd.f32 %v344, %v436
    %v438 = vpop.f32.mrb[0].mxu0
    %439 = vmatprep.mubr.f32.mxu0 0.0
    %440 = vmatmul.mubr.f32.gmra.mrb[0].mxu0 %v350
    %v441 = vpop.f32.mrb[0].mxu0
    %v442 = vadd.f32 %v344, %v441
    %v443 = vpop.f32.mrb[0].mxu0
    %444 = vmatprep.mubr.f32.mxu0 0.0
    %445 = vmatmul.mubr.f32.gmra.mrb[0].mxu0 %v353
    %v446 = vpop.f32.mrb[0].mxu0
    %v447 = vadd.f32 %v344, %v446
    %v448 = vpop.f32.mrb[0].mxu0
    %449 = vmatprep.mubr.f32.mxu0 0.0
    %450 = vmatmul.mubr.f32.gmra.mrb[0].mxu0 %v356
    %v451 = vpop.f32.mrb[0].mxu0
    %v452 = vadd.f32 %v344, %v451
    %v453 = vpop.f32.mrb[0].mxu0
    %454 = vmatprep.mubr.f32.mxu0 0.0
    %455 = vmatmul.mubr.f32.gmra.mrb[0].mxu0 %v359
    %v456 = vpop.f32.mrb[0].mxu0
    %v457 = vadd.f32 %v344, %v456
    %v458 = vpop.f32.mrb[0].mxu0
    %459 = vmatprep.mubr.f32.mxu0 0.0
    %460 = vmatmul.mubr.f32.gmra.mrb[0].mxu0 %v362
    %v461 = vpop.f32.mrb[0].mxu0
    %v462 = vadd.f32 %v344, %v461
    %v463 = vpop.f32.mrb[0].mxu0
    %464 = vmatprep.mubr.f32.mxu0 0.0
    %465 = vmatmul.mubr.f32.gmra.mrb[0].mxu0 %v365
    %v466 = vpop.f32.mrb[0].mxu0
    %v467 = vadd.f32 %v344, %v466
    %v468 = vpop.f32.mrb[0].mxu0
    %469 = vmatprep.mubr.f32.mxu0 0.0
    %470 = vmatmul.mubr.f32.gmra.mrb[0].mxu0 %v368
    %v471 = vpop.f32.mrb[0].mxu0
    %v472 = vadd.f32 %v344, %v471
    %v473 = vpop.f32.mrb[0].mxu0
    %474 = vdwg.mxu0
    %v475 = vmax.f32 %v437, 0.0
    %v476 = vmax.f32 %v442, 0.0
    %v477 = vmax.f32 %v447, 0.0
    %v478 = vmax.f32 %v452, 0.0
    %v479 = vmax.f32 %v457, 0.0
    %v480 = vmax.f32 %v462, 0.0
    %v481 = vmax.f32 %v467, 0.0
    %v482 = vmax.f32 %v472, 0.0
    %v483 = vadd.f32 %v475, %v327
    %v484 = vadd.f32 %v476, %v328
    %v485 = vadd.f32 %v477, %v329
    %v486 = vadd.f32 %v478, %v330
    %v487 = vadd.f32 %v479, %v331
    %v488 = vadd.f32 %v480, %v332
    %v489 = vadd.f32 %v481, %v333
    %v490 = vadd.f32 %v482, %v334
    %491 = vst.msk [vmem:[#allocation4] sm:$0xff] %vm204, %v483
    %492 = vst.msk [vmem:[#allocation4 + $0x8] sm:$0xff] %vm204, %v484
    %493 = vst.msk [vmem:[#allocation4 + $0x10] sm:$0xff] %vm204, %v485
    %494 = vst.msk [vmem:[#allocation4 + $0x18] sm:$0xff] %vm204, %v486
    %495 = vst.msk [vmem:[#allocation4 + $0x20] sm:$0xff] %vm204, %v487
    %496 = vst.msk [vmem:[#allocation4 + $0x28] sm:$0xff] %vm204, %v488
    %497 = vst.msk [vmem:[#allocation4 + $0x30] sm:$0xff] %vm204, %v489
    %498 = vst.msk [vmem:[#allocation4 + $0x38] sm:$0xff] %vm204, %v490
    %v499 = vld [vmem:[%s2] sm:$0xff]
    %v500 = vld [vmem:[%s2 + $0x8] sm:$0xff]
    %v501 = vld [vmem:[%s2 + $0x10] sm:$0xff]
    %v502 = vld [vmem:[%s2 + $0x18] sm:$0xff]
    %s503 = smul.u32 0, 8
    %s504 = ssub.s32 8, %s503
    %p505 = scmp.lt.s32.totalorder %s504, 8
    %s506 = scalar_select %p505, %s504, 8
    %v507 = vld [vmem:[#allocation2] sm:$0xff]
    // While loop
    $region62: #{tpu_custom_call.1} parent=1 // loop_pre_header
      _
    $region63: #{tpu_custom_call.1} parent=1 // loop_header
      %s509 = sphi 0, %s511
      %p510 = scmp.ge.s32.totalorder %s509, %s506
      %v514 = vphi %v507, %v595
    $region64: #{tpu_custom_call.1} parent=1 // loop_header_branch
      %513 = sbr.rel (%p510) target = $region68
    $region65: #{tpu_custom_call.1} parent=1 // loop_body
      %s515 = smul.u32 %s509, 8
      %s516 = scalar_lea.vmem [#allocation3], %s515
      %v517 = vld [vmem:[%s516] sm:$0xff]
      %s518 = scalar_lea.vmem [#allocation5], %s515
      %519 = vst.msk [vmem:[%s518] sm:$0xff] %vm204, %v514
      %v521 = vsel %vm204, %v514, 0
      %523 = vmatprep.subr.mxu0 0.0
      %524 = vmatpush1.msra.mxu0 %v499
      %525 = vmatprep.subr.mxu0 0.0
      %526 = vmatpush1.msra.mxu0 %v500
      %527 = vmatprep.subr.mxu0 0.0
      %528 = vmatpush1.msra.mxu0 %v501
      %529 = vmatprep.subr.mxu0 0.0
      %530 = vmatpush1.msra.mxu0 %v502
      %531 = vmatprep.subr.mxu0 0.0
      %532 = vmatpush1.msra.mxu0 0.0
      %533 = vmatprep.subr.mxu0 0.0
      %534 = vmatpush1.msra.mxu0 0.0
      %535 = vmatprep.subr.mxu0 0.0
      %536 = vmatpush1.msra.mxu0 0.0
      %537 = vmatprep.subr.mxu0 0.0
      %538 = vmatpush1.msra.mxu0 0.0
      %539 = vmatprep.subr.mxu0 0.0
      %540 = vmatpush1.msra.mxu0 0.0
      %541 = vmatprep.subr.mxu0 0.0
      %542 = vmatpush1.msra.mxu0 0.0
      %543 = vmatprep.subr.mxu0 0.0
      %544 = vmatpush1.msra.mxu0 0.0
      %545 = vmatprep.subr.mxu0 0.0
      %546 = vmatpush1.msra.mxu0 0.0
      %547 = vmatprep.subr.mxu0 0.0
      %548 = vmatpush1.msra.mxu0 0.0
      %549 = vmatprep.subr.mxu0 0.0
      %550 = vmatpush1.msra.mxu0 0.0
      %551 = vmatprep.subr.mxu0 0.0
      %552 = vmatpush1.msra.mxu0 0.0
      %553 = vmatprep.subr.mxu0 0.0
      %554 = vmatpush1.msra.mxu0 0.0
      %555 = vmatprep.subr.mxu0 0.0
      %556 = vmatpush1.msra.mxu0 0.0
      %557 = vmatprep.subr.mxu0 0.0
      %558 = vmatpush1.msra.mxu0 0.0
      %559 = vmatprep.subr.mxu0 0.0
      %560 = vmatpush1.msra.mxu0 0.0
      %561 = vmatprep.subr.mxu0 0.0
      %562 = vmatpush1.msra.mxu0 0.0
      %563 = vmatprep.subr.mxu0 0.0
      %564 = vmatpush1.msra.mxu0 0.0
      %565 = vmatprep.subr.mxu0 0.0
      %566 = vmatpush1.msra.mxu0 0.0
      %567 = vmatprep.subr.mxu0 0.0
      %568 = vmatpush1.msra.mxu0 0.0
      %569 = vmatprep.subr.mxu0 0.0
      %570 = vmatpush1.msra.mxu0 0.0
      %571 = vmatprep.subr.mxu0 0.0
      %572 = vmatpush1.msra.mxu0 0.0
      %573 = vmatprep.subr.mxu0 0.0
      %574 = vmatpush1.msra.mxu0 0.0
      %575 = vmatprep.subr.mxu0 0.0
      %576 = vmatpush1.msra.mxu0 0.0
      %577 = vmatprep.subr.mxu0 0.0
      %578 = vmatpush1.msra.mxu0 0.0
      %579 = vmatprep.subr.mxu0 0.0
      %580 = vmatpush1.msra.mxu0 0.0
      %581 = vmatprep.subr.mxu0 0.0
      %582 = vmatpush1.msra.mxu0 0.0
      %583 = vmatprep.subr.mxu0 0.0
      %584 = vmatpush1.msra.mxu0 0.0
      %585 = vmatprep.subr.mxu0 0.0
      %586 = vmatpush1.msra.mxu0 0.0
      %587 = vmatprep.mubr.f32.mxu0 0.0
      %588 = vmatmul.mubr.f32.gmra.mrb[0].mxu0 %v521
      %v589 = vpop.f32.mrb[0].mxu0
      %v590 = vadd.f32 %v517, %v589
      %v591 = vpop.f32.mrb[0].mxu0
      %592 = vdwg.mxu0
      %v593 = vmax.f32 %v590, 0.0
      %v594 = vmul.f32 %v514, 0.0
      %v595 = vadd.f32 %v594, %v593
    $region66: #{tpu_custom_call.1} parent=1 // loop_footer
      %s511 = sadd.s32 %s509, 1
    $region67: #{tpu_custom_call.1} parent=1 // loop_footer_branch
      %508 = sbr.rel target = $region63
    $region68: #{tpu_custom_call.1} parent=1 // loop_exit
      _
    %596 = vst.msk [vmem:[#allocation2] sm:$0xff] %vm204, %v514
    %597 = vst.msk [vmem:[#allocation6] sm:$0xff] %vm204, %v514
    %v598 = vld [vmem:[#allocation5] sm:$0xff]
    %v599 = vld [vmem:[#allocation5 + $0x8] sm:$0xff]
    %v600 = vld [vmem:[#allocation5 + $0x10] sm:$0xff]
    %v601 = vld [vmem:[#allocation5 + $0x18] sm:$0xff]
    %v602 = vld [vmem:[#allocation5 + $0x20] sm:$0xff]
    %v603 = vld [vmem:[#allocation5 + $0x28] sm:$0xff]
    %v604 = vld [vmem:[#allocation5 + $0x30] sm:$0xff]
    %v605 = vld [vmem:[#allocation5 + $0x38] sm:$0xff]
    %v606 = vld [vmem:[%s9] sm:$0xff]
    %v607 = vld [vmem:[%s9 + $0x8] sm:$0xff]
    %v608 = vld [vmem:[%s9 + $0x10] sm:$0xff]
    %v609 = vld [vmem:[%s9 + $0x18] sm:$0xff]
    %v610 = vld [vmem:[%s9 + $0x20] sm:$0xff]
    %v611 = vld [vmem:[%s9 + $0x28] sm:$0xff]
    %v612 = vld [vmem:[%s9 + $0x30] sm:$0xff]
    %v613 = vld [vmem:[%s9 + $0x38] sm:$0xff]
    %v614 = vld [vmem:[%s10] sm:$0x3]
    %v616 = vlaneseq
    %v617 = vshrl.u32 %v616, 7
    %v618 = vsub.s32 0, %v617
    %v619 = vrot.slane %v614, %v618
    %v620 = vlaneseq
    %v621 = vshrl.u32 %v620, 7
    %v622 = vsub.s32 1, %v621
    %v623 = vrot.slane %v614, %v622
    %v627 = vsel %vm204, %v598, 0
    %v630 = vsel %vm204, %v599, 0
    %v633 = vsel %vm204, %v600, 0
    %v636 = vsel %vm204, %v601, 0
    %v639 = vsel %vm204, %v602, 0
    %v642 = vsel %vm204, %v603, 0
    %v645 = vsel %vm204, %v604, 0
    %v648 = vsel %vm204, %v605, 0
    %650 = vmatprep.subr.mxu0 %v607
    %651 = vmatpush1.msra.mxu0 %v606
    %652 = vmatprep.subr.mxu0 %v609
    %653 = vmatpush1.msra.mxu0 %v608
    %654 = vmatprep.subr.mxu0 %v611
    %655 = vmatpush1.msra.mxu0 %v610
    %656 = vmatprep.subr.mxu0 %v613
    %657 = vmatpush1.msra.mxu0 %v612
    %658 = vmatprep.subr.mxu0 0.0
    %659 = vmatpush1.msra.mxu0 0.0
    %660 = vmatprep.subr.mxu0 0.0
    %661 = vmatpush1.msra.mxu0 0.0
    %662 = vmatprep.subr.mxu0 0.0
    %663 = vmatpush1.msra.mxu0 0.0
    %664 = vmatprep.subr.mxu0 0.0
    %665 = vmatpush1.msra.mxu0 0.0
    %666 = vmatprep.subr.mxu0 0.0
    %667 = vmatpush1.msra.mxu0 0.0
    %668 = vmatprep.subr.mxu0 0.0
    %669 = vmatpush1.msra.mxu0 0.0
    %670 = vmatprep.subr.mxu0 0.0
    %671 = vmatpush1.msra.mxu0 0.0
    %672 = vmatprep.subr.mxu0 0.0
    %673 = vmatpush1.msra.mxu0 0.0
    %674 = vmatprep.subr.mxu0 0.0
    %675 = vmatpush1.msra.mxu0 0.0
    %676 = vmatprep.subr.mxu0 0.0
    %677 = vmatpush1.msra.mxu0 0.0
    %678 = vmatprep.subr.mxu0 0.0
    %679 = vmatpush1.msra.mxu0 0.0
    %680 = vmatprep.subr.mxu0 0.0
    %681 = vmatpush1.msra.mxu0 0.0
    %682 = vmatprep.subr.mxu0 0.0
    %683 = vmatpush1.msra.mxu0 0.0
    %684 = vmatprep.subr.mxu0 0.0
    %685 = vmatpush1.msra.mxu0 0.0
    %686 = vmatprep.subr.mxu0 0.0
    %687 = vmatpush1.msra.mxu0 0.0
    %688 = vmatprep.subr.mxu0 0.0
    %689 = vmatpush1.msra.mxu0 0.0
    %690 = vmatprep.subr.mxu0 0.0
    %691 = vmatpush1.msra.mxu0 0.0
    %692 = vmatprep.subr.mxu0 0.0
    %693 = vmatpush1.msra.mxu0 0.0
    %694 = vmatprep.subr.mxu0 0.0
    %695 = vmatpush1.msra.mxu0 0.0
    %696 = vmatprep.subr.mxu0 0.0
    %697 = vmatpush1.msra.mxu0 0.0
    %698 = vmatprep.subr.mxu0 0.0
    %699 = vmatpush1.msra.mxu0 0.0
    %700 = vmatprep.subr.mxu0 0.0
    %701 = vmatpush1.msra.mxu0 0.0
    %702 = vmatprep.subr.mxu0 0.0
    %703 = vmatpush1.msra.mxu0 0.0
    %704 = vmatprep.subr.mxu0 0.0
    %705 = vmatpush1.msra.mxu0 0.0
    %706 = vmatprep.subr.mxu0 0.0
    %707 = vmatpush1.msra.mxu0 0.0
    %708 = vmatprep.subr.mxu0 0.0
    %709 = vmatpush1.msra.mxu0 0.0
    %710 = vmatprep.subr.mxu0 0.0
    %711 = vmatpush1.msra.mxu0 0.0
    %712 = vmatprep.subr.mxu0 0.0
    %713 = vmatpush1.msra.mxu0 0.0
    %714 = vmatprep.mubr.f32.mxu0 0.0
    %715 = vmatmul.mubr.f32.gmra.mrb[0].mxu0 %v627
    %v716 = vpop.f32.mrb[0].mxu0
    %v717 = vadd.f32 %v619, %v716
    %v718 = vpop.f32.mrb[0].mxu0
    %v719 = vadd.f32 %v623, %v718
    %720 = vmatprep.mubr.f32.mxu0 0.0
    %721 = vmatmul.mubr.f32.gmra.mrb[0].mxu0 %v630
    %v722 = vpop.f32.mrb[0].mxu0
    %v723 = vadd.f32 %v619, %v722
    %v724 = vpop.f32.mrb[0].mxu0
    %v725 = vadd.f32 %v623, %v724
    %726 = vmatprep.mubr.f32.mxu0 0.0
    %727 = vmatmul.mubr.f32.gmra.mrb[0].mxu0 %v633
    %v728 = vpop.f32.mrb[0].mxu0
    %v729 = vadd.f32 %v619, %v728
    %v730 = vpop.f32.mrb[0].mxu0
    %v731 = vadd.f32 %v623, %v730
    %732 = vmatprep.mubr.f32.mxu0 0.0
    %733 = vmatmul.mubr.f32.gmra.mrb[0].mxu0 %v636
    %v734 = vpop.f32.mrb[0].mxu0
    %v735 = vadd.f32 %v619, %v734
    %v736 = vpop.f32.mrb[0].mxu0
    %v737 = vadd.f32 %v623, %v736
    %738 = vmatprep.mubr.f32.mxu0 0.0
    %739 = vmatmul.mubr.f32.gmra.mrb[0].mxu0 %v639
    %v740 = vpop.f32.mrb[0].mxu0
    %v741 = vadd.f32 %v619, %v740
    %v742 = vpop.f32.mrb[0].mxu0
    %v743 = vadd.f32 %v623, %v742
    %744 = vmatprep.mubr.f32.mxu0 0.0
    %745 = vmatmul.mubr.f32.gmra.mrb[0].mxu0 %v642
    %v746 = vpop.f32.mrb[0].mxu0
    %v747 = vadd.f32 %v619, %v746
    %v748 = vpop.f32.mrb[0].mxu0
    %v749 = vadd.f32 %v623, %v748
    %750 = vmatprep.mubr.f32.mxu0 0.0
    %751 = vmatmul.mubr.f32.gmra.mrb[0].mxu0 %v645
    %v752 = vpop.f32.mrb[0].mxu0
    %v753 = vadd.f32 %v619, %v752
    %v754 = vpop.f32.mrb[0].mxu0
    %v755 = vadd.f32 %v623, %v754
    %756 = vmatprep.mubr.f32.mxu0 0.0
    %757 = vmatmul.mubr.f32.gmra.mrb[0].mxu0 %v648
    %v758 = vpop.f32.mrb[0].mxu0
    %v759 = vadd.f32 %v619, %v758
    %v760 = vpop.f32.mrb[0].mxu0
    %v761 = vadd.f32 %v623, %v760
    %762 = vdwg.mxu0
    %v763 = vld [vmem:[%s11] sm:$0xff]
    %v764 = vld [vmem:[%s11 + $0x8] sm:$0xff]
    %v765 = vld [vmem:[%s11 + $0x10] sm:$0xff]
    %v766 = vld [vmem:[%s11 + $0x18] sm:$0xff]
    %v767 = vld [vmem:[%s11 + $0x20] sm:$0xff]
    %v768 = vld [vmem:[%s11 + $0x28] sm:$0xff]
    %v769 = vld [vmem:[%s11 + $0x30] sm:$0xff]
    %v770 = vld [vmem:[%s11 + $0x38] sm:$0xff]
    %v771 = vld [vmem:[%s11 + $0x40] sm:$0xff]
    %v772 = vld [vmem:[%s11 + $0x48] sm:$0xff]
    %v773 = vld [vmem:[%s11 + $0x50] sm:$0xff]
    %v774 = vld [vmem:[%s11 + $0x58] sm:$0xff]
    %v775 = vld [vmem:[%s11 + $0x60] sm:$0xff]
    %v776 = vld [vmem:[%s11 + $0x68] sm:$0xff]
    %v777 = vld [vmem:[%s11 + $0x70] sm:$0xff]
    %v778 = vld [vmem:[%s11 + $0x78] sm:$0xff]
    %v779 = vld [vmem:[%s11 + $0x80] sm:$0xff]
    %v780 = vld [vmem:[%s11 + $0x88] sm:$0xff]
    %v781 = vld [vmem:[%s11 + $0x90] sm:$0xff]
    %v782 = vld [vmem:[%s11 + $0x98] sm:$0xff]
    %v783 = vld [vmem:[%s11 + $0xa0] sm:$0xff]
    %v784 = vld [vmem:[%s11 + $0xa8] sm:$0xff]
    %v785 = vld [vmem:[%s11 + $0xb0] sm:$0xff]
    %v786 = vld [vmem:[%s11 + $0xb8] sm:$0xff]
    %v787 = vld [vmem:[%s11 + $0xc0] sm:$0xff]
    %v788 = vld [vmem:[%s11 + $0xc8] sm:$0xff]
    %v789 = vld [vmem:[%s11 + $0xd0] sm:$0xff]
    %v790 = vld [vmem:[%s11 + $0xd8] sm:$0xff]
    %v791 = vld [vmem:[%s11 + $0xe0] sm:$0xff]
    %v792 = vld [vmem:[%s11 + $0xe8] sm:$0xff]
    %v793 = vld [vmem:[%s11 + $0xf0] sm:$0xff]
    %v794 = vld [vmem:[%s11 + $0xf8] sm:$0xff]
    %v795 = vld [vmem:[%s12] sm:$0xff]
    %v796 = vld [vmem:[%s12 + $0x8] sm:$0xff]
    %797 = vmatprep.subr.mxu0 0.0
    %798 = vmatpush1.msra.mxu0 %v763
    %799 = vmatprep.subr.mxu0 0.0
    %800 = vmatpush1.msra.mxu0 %v764
    %801 = vmatprep.subr.mxu0 0.0
    %802 = vmatpush1.msra.mxu0 %v765
    %803 = vmatprep.subr.mxu0 0.0
    %804 = vmatpush1.msra.mxu0 %v766
    %805 = vmatprep.subr.mxu0 0.0
    %806 = vmatpush1.msra.mxu0 %v767
    %807 = vmatprep.subr.mxu0 0.0
    %808 = vmatpush1.msra.mxu0 %v768
    %809 = vmatprep.subr.mxu0 0.0
    %810 = vmatpush1.msra.mxu0 %v769
    %811 = vmatprep.subr.mxu0 0.0
    %812 = vmatpush1.msra.mxu0 %v770
    %813 = vmatprep.subr.mxu0 0.0
    %814 = vmatpush1.msra.mxu0 %v771
    %815 = vmatprep.subr.mxu0 0.0
    %816 = vmatpush1.msra.mxu0 %v772
    %817 = vmatprep.subr.mxu0 0.0
    %818 = vmatpush1.msra.mxu0 %v773
    %819 = vmatprep.subr.mxu0 0.0
    %820 = vmatpush1.msra.mxu0 %v774
    %821 = vmatprep.subr.mxu0 0.0
    %822 = vmatpush1.msra.mxu0 %v775
    %823 = vmatprep.subr.mxu0 0.0
    %824 = vmatpush1.msra.mxu0 %v776
    %825 = vmatprep.subr.mxu0 0.0
    %826 = vmatpush1.msra.mxu0 %v777
    %827 = vmatprep.subr.mxu0 0.0
    %828 = vmatpush1.msra.mxu0 %v778
    %829 = vmatprep.subr.mxu0 0.0
    %830 = vmatpush1.msra.mxu0 %v779
    %831 = vmatprep.subr.mxu0 0.0
    %832 = vmatpush1.msra.mxu0 %v780
    %833 = vmatprep.subr.mxu0 0.0
    %834 = vmatpush1.msra.mxu0 %v781
    %835 = vmatprep.subr.mxu0 0.0
    %836 = vmatpush1.msra.mxu0 %v782
    %837 = vmatprep.subr.mxu0 0.0
    %838 = vmatpush1.msra.mxu0 %v783
    %839 = vmatprep.subr.mxu0 0.0
    %840 = vmatpush1.msra.mxu0 %v784
    %841 = vmatprep.subr.mxu0 0.0
    %842 = vmatpush1.msra.mxu0 %v785
    %843 = vmatprep.subr.mxu0 0.0
    %844 = vmatpush1.msra.mxu0 %v786
    %845 = vmatprep.subr.mxu0 0.0
    %846 = vmatpush1.msra.mxu0 %v787
    %847 = vmatprep.subr.mxu0 0.0
    %848 = vmatpush1.msra.mxu0 %v788
    %849 = vmatprep.subr.mxu0 0.0
    %850 = vmatpush1.msra.mxu0 %v789
    %851 = vmatprep.subr.mxu0 0.0
    %852 = vmatpush1.msra.mxu0 %v790
    %853 = vmatprep.subr.mxu0 0.0
    %854 = vmatpush1.msra.mxu0 %v791
    %855 = vmatprep.subr.mxu0 0.0
    %856 = vmatpush1.msra.mxu0 %v792
    %857 = vmatprep.subr.mxu0 0.0
    %858 = vmatpush1.msra.mxu0 %v793
    %859 = vmatprep.subr.mxu0 0.0
    %860 = vmatpush1.msra.mxu0 %v794
    %861 = vmatprep.mubr.f32.mxu0 %v719
    %862 = vmatmul.mubr.f32.gmra.mrb[0].mxu0 %v717
    %v863 = vpop.f32.mrb[0].mxu0
    %v864 = vadd.f32 0.0, %v863
    %v865 = vpop.f32.mrb[0].mxu0
    %866 = vmatprep.mubr.f32.mxu0 %v725
    %867 = vmatmul.mubr.f32.gmra.mrb[0].mxu0 %v723
    %v868 = vpop.f32.mrb[0].mxu0
    %v869 = vadd.f32 0.0, %v868
    %v870 = vpop.f32.mrb[0].mxu0
    %871 = vmatprep.mubr.f32.mxu0 %v731
    %872 = vmatmul.mubr.f32.gmra.mrb[0].mxu0 %v729
    %v873 = vpop.f32.mrb[0].mxu0
    %v874 = vadd.f32 0.0, %v873
    %v875 = vpop.f32.mrb[0].mxu0
    %876 = vmatprep.mubr.f32.mxu0 %v737
    %877 = vmatmul.mubr.f32.gmra.mrb[0].mxu0 %v735
    %v878 = vpop.f32.mrb[0].mxu0
    %v879 = vadd.f32 0.0, %v878
    %v880 = vpop.f32.mrb[0].mxu0
    %881 = vmatprep.mubr.f32.mxu0 %v743
    %882 = vmatmul.mubr.f32.gmra.mrb[0].mxu0 %v741
    %v883 = vpop.f32.mrb[0].mxu0
    %v884 = vadd.f32 0.0, %v883
    %v885 = vpop.f32.mrb[0].mxu0
    %886 = vmatprep.mubr.f32.mxu0 %v749
    %887 = vmatmul.mubr.f32.gmra.mrb[0].mxu0 %v747
    %v888 = vpop.f32.mrb[0].mxu0
    %v889 = vadd.f32 0.0, %v888
    %v890 = vpop.f32.mrb[0].mxu0
    %891 = vmatprep.mubr.f32.mxu0 %v755
    %892 = vmatmul.mubr.f32.gmra.mrb[0].mxu0 %v753
    %v893 = vpop.f32.mrb[0].mxu0
    %v894 = vadd.f32 0.0, %v893
    %v895 = vpop.f32.mrb[0].mxu0
    %896 = vmatprep.mubr.f32.mxu0 %v761
    %897 = vmatmul.mubr.f32.gmra.mrb[0].mxu0 %v759
    %v898 = vpop.f32.mrb[0].mxu0
    %v899 = vadd.f32 0.0, %v898
    %v900 = vpop.f32.mrb[0].mxu0
    %901 = vdwg.mxu0
    %v902 = vmul.f32 %v864, 0.03125
    %v903 = vmul.f32 %v869, 0.03125
    %v904 = vmul.f32 %v874, 0.03125
    %v905 = vmul.f32 %v879, 0.03125
    %v906 = vmul.f32 %v884, 0.03125
    %v907 = vmul.f32 %v889, 0.03125
    %v908 = vmul.f32 %v894, 0.03125
    %v909 = vmul.f32 %v899, 0.03125
    %vm910 = vcmask 64512
    %v912 = vsel %vm910, %v902, 0
    %v915 = vsel %vm910, %v903, 0
    %v918 = vsel %vm910, %v904, 0
    %v921 = vsel %vm910, %v905, 0
    %v924 = vsel %vm910, %v906, 0
    %v927 = vsel %vm910, %v907, 0
    %v930 = vsel %vm910, %v908, 0
    %v933 = vsel %vm910, %v909, 0
    %935 = vmatprep.subr.mxu0 %v796
    %936 = vmatpush1.msra.mxu0 %v795
    %937 = vmatprep.subr.mxu0 0.0
    %938 = vmatpush1.msra.mxu0 0.0
    %939 = vmatprep.subr.mxu0 0.0
    %940 = vmatpush1.msra.mxu0 0.0
    %941 = vmatprep.subr.mxu0 0.0
    %942 = vmatpush1.msra.mxu0 0.0
    %943 = vmatprep.subr.mxu0 0.0
    %944 = vmatpush1.msra.mxu0 0.0
    %945 = vmatprep.subr.mxu0 0.0
    %946 = vmatpush1.msra.mxu0 0.0
    %947 = vmatprep.subr.mxu0 0.0
    %948 = vmatpush1.msra.mxu0 0.0
    %949 = vmatprep.subr.mxu0 0.0
    %950 = vmatpush1.msra.mxu0 0.0
    %951 = vmatprep.subr.mxu0 0.0
    %952 = vmatpush1.msra.mxu0 0.0
    %953 = vmatprep.subr.mxu0 0.0
    %954 = vmatpush1.msra.mxu0 0.0
    %955 = vmatprep.subr.mxu0 0.0
    %956 = vmatpush1.msra.mxu0 0.0
    %957 = vmatprep.subr.mxu0 0.0
    %958 = vmatpush1.msra.mxu0 0.0
    %959 = vmatprep.subr.mxu0 0.0
    %960 = vmatpush1.msra.mxu0 0.0
    %961 = vmatprep.subr.mxu0 0.0
    %962 = vmatpush1.msra.mxu0 0.0
    %963 = vmatprep.subr.mxu0 0.0
    %964 = vmatpush1.msra.mxu0 0.0
    %965 = vmatprep.subr.mxu0 0.0
    %966 = vmatpush1.msra.mxu0 0.0
    %967 = vmatprep.subr.mxu0 0.0
    %968 = vmatpush1.msra.mxu0 0.0
    %969 = vmatprep.subr.mxu0 0.0
    %970 = vmatpush1.msra.mxu0 0.0
    %971 = vmatprep.subr.mxu0 0.0
    %972 = vmatpush1.msra.mxu0 0.0
    %973 = vmatprep.subr.mxu0 0.0
    %974 = vmatpush1.msra.mxu0 0.0
    %975 = vmatprep.subr.mxu0 0.0
    %976 = vmatpush1.msra.mxu0 0.0
    %977 = vmatprep.subr.mxu0 0.0
    %978 = vmatpush1.msra.mxu0 0.0
    %979 = vmatprep.subr.mxu0 0.0
    %980 = vmatpush1.msra.mxu0 0.0
    %981 = vmatprep.subr.mxu0 0.0
    %982 = vmatpush1.msra.mxu0 0.0
    %983 = vmatprep.subr.mxu0 0.0
    %984 = vmatpush1.msra.mxu0 0.0
    %985 = vmatprep.subr.mxu0 0.0
    %986 = vmatpush1.msra.mxu0 0.0
    %987 = vmatprep.subr.mxu0 0.0
    %988 = vmatpush1.msra.mxu0 0.0
    %989 = vmatprep.subr.mxu0 0.0
    %990 = vmatpush1.msra.mxu0 0.0
    %991 = vmatprep.subr.mxu0 0.0
    %992 = vmatpush1.msra.mxu0 0.0
    %993 = vmatprep.subr.mxu0 0.0
    %994 = vmatpush1.msra.mxu0 0.0
    %995 = vmatprep.subr.mxu0 0.0
    %996 = vmatpush1.msra.mxu0 0.0
    %997 = vmatprep.subr.mxu0 0.0
    %998 = vmatpush1.msra.mxu0 0.0
    %999 = vmatprep.mubr.f32.mxu0 0.0
    %1000 = vmatmul.mubr.f32.gmra.mrb[0].mxu0 %v912
    %v1001 = vpop.f32.mrb[0].mxu0
    %v1002 = vadd.f32 0.0, %v1001
    %v1003 = vpop.f32.mrb[0].mxu0
    %v1004 = vadd.f32 0.0, %v1003
    %1005 = vmatprep.mubr.f32.mxu0 0.0
    %1006 = vmatmul.mubr.f32.gmra.mrb[0].mxu0 %v915
    %v1007 = vpop.f32.mrb[0].mxu0
    %v1008 = vadd.f32 0.0, %v1007
    %v1009 = vpop.f32.mrb[0].mxu0
    %v1010 = vadd.f32 0.0, %v1009
    %1011 = vmatprep.mubr.f32.mxu0 0.0
    %1012 = vmatmul.mubr.f32.gmra.mrb[0].mxu0 %v918
    %v1013 = vpop.f32.mrb[0].mxu0
    %v1014 = vadd.f32 0.0, %v1013
    %v1015 = vpop.f32.mrb[0].mxu0
    %v1016 = vadd.f32 0.0, %v1015
    %1017 = vmatprep.mubr.f32.mxu0 0.0
    %1018 = vmatmul.mubr.f32.gmra.mrb[0].mxu0 %v921
    %v1019 = vpop.f32.mrb[0].mxu0
    %v1020 = vadd.f32 0.0, %v1019
    %v1021 = vpop.f32.mrb[0].mxu0
    %v1022 = vadd.f32 0.0, %v1021
    %1023 = vmatprep.mubr.f32.mxu0 0.0
    %1024 = vmatmul.mubr.f32.gmra.mrb[0].mxu0 %v924
    %v1025 = vpop.f32.mrb[0].mxu0
    %v1026 = vadd.f32 0.0, %v1025
    %v1027 = vpop.f32.mrb[0].mxu0
    %v1028 = vadd.f32 0.0, %v1027
    %1029 = vmatprep.mubr.f32.mxu0 0.0
    %1030 = vmatmul.mubr.f32.gmra.mrb[0].mxu0 %v927
    %v1031 = vpop.f32.mrb[0].mxu0
    %v1032 = vadd.f32 0.0, %v1031
    %v1033 = vpop.f32.mrb[0].mxu0
    %v1034 = vadd.f32 0.0, %v1033
    %1035 = vmatprep.mubr.f32.mxu0 0.0
    %1036 = vmatmul.mubr.f32.gmra.mrb[0].mxu0 %v930
    %v1037 = vpop.f32.mrb[0].mxu0
    %v1038 = vadd.f32 0.0, %v1037
    %v1039 = vpop.f32.mrb[0].mxu0
    %v1040 = vadd.f32 0.0, %v1039
    %1041 = vmatprep.mubr.f32.mxu0 0.0
    %1042 = vmatmul.mubr.f32.gmra.mrb[0].mxu0 %v933
    %v1043 = vpop.f32.mrb[0].mxu0
    %v1044 = vadd.f32 0.0, %v1043
    %v1045 = vpop.f32.mrb[0].mxu0
    %v1046 = vadd.f32 0.0, %v1045
    %1047 = vdwg.mxu0
    %v1048 = vsub.f32 %v717, %v1002
    %v1049 = vsub.f32 %v719, %v1004
    %v1050 = vsub.f32 %v723, %v1008
    %v1051 = vsub.f32 %v725, %v1010
    %v1052 = vsub.f32 %v729, %v1014
    %v1053 = vsub.f32 %v731, %v1016
    %v1054 = vsub.f32 %v735, %v1020
    %v1055 = vsub.f32 %v737, %v1022
    %v1056 = vsub.f32 %v741, %v1026
    %v1057 = vsub.f32 %v743, %v1028
    %v1058 = vsub.f32 %v747, %v1032
    %v1059 = vsub.f32 %v749, %v1034
    %v1060 = vsub.f32 %v753, %v1038
    %v1061 = vsub.f32 %v755, %v1040
    %v1062 = vsub.f32 %v759, %v1044
    %v1063 = vsub.f32 %v761, %v1046
    %v1064 = vmul.f32 %v1048, %v1048
    %v1065 = vmul.f32 %v1049, %v1049
    %v1066 = vmul.f32 %v1050, %v1050
    %v1067 = vmul.f32 %v1051, %v1051
    %v1068 = vmul.f32 %v1052, %v1052
    %v1069 = vmul.f32 %v1053, %v1053
    %v1070 = vmul.f32 %v1054, %v1054
    %v1071 = vmul.f32 %v1055, %v1055
    %v1072 = vmul.f32 %v1056, %v1056
    %v1073 = vmul.f32 %v1057, %v1057
    %v1074 = vmul.f32 %v1058, %v1058
    %v1075 = vmul.f32 %v1059, %v1059
    %v1076 = vmul.f32 %v1060, %v1060
    %v1077 = vmul.f32 %v1061, %v1061
    %v1078 = vmul.f32 %v1062, %v1062
    %v1079 = vmul.f32 %v1063, %v1063
    %1080 = vmatprep.subr.mxu0 0.0
    %1081 = vmatpush1.msra.mxu0 %v763
    %1082 = vmatprep.subr.mxu0 0.0
    %1083 = vmatpush1.msra.mxu0 %v764
    %1084 = vmatprep.subr.mxu0 0.0
    %1085 = vmatpush1.msra.mxu0 %v765
    %1086 = vmatprep.subr.mxu0 0.0
    %1087 = vmatpush1.msra.mxu0 %v766
    %1088 = vmatprep.subr.mxu0 0.0
    %1089 = vmatpush1.msra.mxu0 %v767
    %1090 = vmatprep.subr.mxu0 0.0
    %1091 = vmatpush1.msra.mxu0 %v768
    %1092 = vmatprep.subr.mxu0 0.0
    %1093 = vmatpush1.msra.mxu0 %v769
    %1094 = vmatprep.subr.mxu0 0.0
    %1095 = vmatpush1.msra.mxu0 %v770
    %1096 = vmatprep.subr.mxu0 0.0
    %1097 = vmatpush1.msra.mxu0 %v771
    %1098 = vmatprep.subr.mxu0 0.0
    %1099 = vmatpush1.msra.mxu0 %v772
    %1100 = vmatprep.subr.mxu0 0.0
    %1101 = vmatpush1.msra.mxu0 %v773
    %1102 = vmatprep.subr.mxu0 0.0
    %1103 = vmatpush1.msra.mxu0 %v774
    %1104 = vmatprep.subr.mxu0 0.0
    %1105 = vmatpush1.msra.mxu0 %v775
    %1106 = vmatprep.subr.mxu0 0.0
    %1107 = vmatpush1.msra.mxu0 %v776
    %1108 = vmatprep.subr.mxu0 0.0
    %1109 = vmatpush1.msra.mxu0 %v777
    %1110 = vmatprep.subr.mxu0 0.0
    %1111 = vmatpush1.msra.mxu0 %v778
    %1112 = vmatprep.subr.mxu0 0.0
    %1113 = vmatpush1.msra.mxu0 %v779
    %1114 = vmatprep.subr.mxu0 0.0
    %1115 = vmatpush1.msra.mxu0 %v780
    %1116 = vmatprep.subr.mxu0 0.0
    %1117 = vmatpush1.msra.mxu0 %v781
    %1118 = vmatprep.subr.mxu0 0.0
    %1119 = vmatpush1.msra.mxu0 %v782
    %1120 = vmatprep.subr.mxu0 0.0
    %1121 = vmatpush1.msra.mxu0 %v783
    %1122 = vmatprep.subr.mxu0 0.0
    %1123 = vmatpush1.msra.mxu0 %v784
    %1124 = vmatprep.subr.mxu0 0.0
    %1125 = vmatpush1.msra.mxu0 %v785
    %1126 = vmatprep.subr.mxu0 0.0
    %1127 = vmatpush1.msra.mxu0 %v786
    %1128 = vmatprep.subr.mxu0 0.0
    %1129 = vmatpush1.msra.mxu0 %v787
    %1130 = vmatprep.subr.mxu0 0.0
    %1131 = vmatpush1.msra.mxu0 %v788
    %1132 = vmatprep.subr.mxu0 0.0
    %1133 = vmatpush1.msra.mxu0 %v789
    %1134 = vmatprep.subr.mxu0 0.0
    %1135 = vmatpush1.msra.mxu0 %v790
    %1136 = vmatprep.subr.mxu0 0.0
    %1137 = vmatpush1.msra.mxu0 %v791
    %1138 = vmatprep.subr.mxu0 0.0
    %1139 = vmatpush1.msra.mxu0 %v792
    %1140 = vmatprep.subr.mxu0 0.0
    %1141 = vmatpush1.msra.mxu0 %v793
    %1142 = vmatprep.subr.mxu0 0.0
    %1143 = vmatpush1.msra.mxu0 %v794
    %1144 = vmatprep.mubr.f32.mxu0 %v1065
    %1145 = vmatmul.mubr.f32.gmra.mrb[0].mxu0 %v1064
    %v1146 = vpop.f32.mrb[0].mxu0
    %v1147 = vadd.f32 0.0, %v1146
    %v1148 = vpop.f32.mrb[0].mxu0
    %1149 = vmatprep.mubr.f32.mxu0 %v1067
    %1150 = vmatmul.mubr.f32.gmra.mrb[0].mxu0 %v1066
    %v1151 = vpop.f32.mrb[0].mxu0
    %v1152 = vadd.f32 0.0, %v1151
    %v1153 = vpop.f32.mrb[0].mxu0
    %1154 = vmatprep.mubr.f32.mxu0 %v1069
    %1155 = vmatmul.mubr.f32.gmra.mrb[0].mxu0 %v1068
    %v1156 = vpop.f32.mrb[0].mxu0
    %v1157 = vadd.f32 0.0, %v1156
    %v1158 = vpop.f32.mrb[0].mxu0
    %1159 = vmatprep.mubr.f32.mxu0 %v1071
    %1160 = vmatmul.mubr.f32.gmra.mrb[0].mxu0 %v1070
    %v1161 = vpop.f32.mrb[0].mxu0
    %v1162 = vadd.f32 0.0, %v1161
    %v1163 = vpop.f32.mrb[0].mxu0
    %1164 = vmatprep.mubr.f32.mxu0 %v1073
    %1165 = vmatmul.mubr.f32.gmra.mrb[0].mxu0 %v1072
    %v1166 = vpop.f32.mrb[0].mxu0
    %v1167 = vadd.f32 0.0, %v1166
    %v1168 = vpop.f32.mrb[0].mxu0
    %1169 = vmatprep.mubr.f32.mxu0 %v1075
    %1170 = vmatmul.mubr.f32.gmra.mrb[0].mxu0 %v1074
    %v1171 = vpop.f32.mrb[0].mxu0
    %v1172 = vadd.f32 0.0, %v1171
    %v1173 = vpop.f32.mrb[0].mxu0
    %1174 = vmatprep.mubr.f32.mxu0 %v1077
    %1175 = vmatmul.mubr.f32.gmra.mrb[0].mxu0 %v1076
    %v1176 = vpop.f32.mrb[0].mxu0
    %v1177 = vadd.f32 0.0, %v1176
    %v1178 = vpop.f32.mrb[0].mxu0
    %1179 = vmatprep.mubr.f32.mxu0 %v1079
    %1180 = vmatmul.mubr.f32.gmra.mrb[0].mxu0 %v1078
    %v1181 = vpop.f32.mrb[0].mxu0
    %v1182 = vadd.f32 0.0, %v1181
    %v1183 = vpop.f32.mrb[0].mxu0
    %1184 = vdwg.mxu0
    %v1185 = vmul.f32 %v1147, 0.03125
    %v1186 = vmul.f32 %v1152, 0.03125
    %v1187 = vmul.f32 %v1157, 0.03125
    %v1188 = vmul.f32 %v1162, 0.03125
    %v1189 = vmul.f32 %v1167, 0.03125
    %v1190 = vmul.f32 %v1172, 0.03125
    %v1191 = vmul.f32 %v1177, 0.03125
    %v1192 = vmul.f32 %v1182, 0.03125
    %v1193 = vadd.f32 %v1185, 1e-05
    %v1194 = vadd.f32 %v1186, 1e-05
    %v1195 = vadd.f32 %v1187, 1e-05
    %v1196 = vadd.f32 %v1188, 1e-05
    %v1197 = vadd.f32 %v1189, 1e-05
    %v1198 = vadd.f32 %v1190, 1e-05
    %v1199 = vadd.f32 %v1191, 1e-05
    %v1200 = vadd.f32 %v1192, 1e-05
    %v1201 = vrsqrt.pop %v1193
    %v1202 = vrsqrt.pop %v1194
    %v1203 = vrsqrt.pop %v1195
    %v1204 = vrsqrt.pop %v1196
    %v1205 = vrsqrt.pop %v1197
    %v1206 = vrsqrt.pop %v1198
    %v1207 = vrsqrt.pop %v1199
    %v1208 = vrsqrt.pop %v1200
    %v1210 = vsel %vm910, %v1201, 0
    %v1213 = vsel %vm910, %v1202, 0
    %v1216 = vsel %vm910, %v1203, 0
    %v1219 = vsel %vm910, %v1204, 0
    %v1222 = vsel %vm910, %v1205, 0
    %v1225 = vsel %vm910, %v1206, 0
    %v1228 = vsel %vm910, %v1207, 0
    %v1231 = vsel %vm910, %v1208, 0
    %1233 = vmatprep.subr.mxu0 %v796
    %1234 = vmatpush1.msra.mxu0 %v795
    %1235 = vmatprep.subr.mxu0 0.0
    %1236 = vmatpush1.msra.mxu0 0.0
    %1237 = vmatprep.subr.mxu0 0.0
    %1238 = vmatpush1.msra.mxu0 0.0
    %1239 = vmatprep.subr.mxu0 0.0
    %1240 = vmatpush1.msra.mxu0 0.0
    %1241 = vmatprep.subr.mxu0 0.0
    %1242 = vmatpush1.msra.mxu0 0.0
    %1243 = vmatprep.subr.mxu0 0.0
    %1244 = vmatpush1.msra.mxu0 0.0
    %1245 = vmatprep.subr.mxu0 0.0
    %1246 = vmatpush1.msra.mxu0 0.0
    %1247 = vmatprep.subr.mxu0 0.0
    %1248 = vmatpush1.msra.mxu0 0.0
    %1249 = vmatprep.subr.mxu0 0.0
    %1250 = vmatpush1.msra.mxu0 0.0
    %1251 = vmatprep.subr.mxu0 0.0
    %1252 = vmatpush1.msra.mxu0 0.0
    %1253 = vmatprep.subr.mxu0 0.0
    %1254 = vmatpush1.msra.mxu0 0.0
    %1255 = vmatprep.subr.mxu0 0.0
    %1256 = vmatpush1.msra.mxu0 0.0
    %1257 = vmatprep.subr.mxu0 0.0
    %1258 = vmatpush1.msra.mxu0 0.0
    %1259 = vmatprep.subr.mxu0 0.0
    %1260 = vmatpush1.msra.mxu0 0.0
    %1261 = vmatprep.subr.mxu0 0.0
    %1262 = vmatpush1.msra.mxu0 0.0
    %1263 = vmatprep.subr.mxu0 0.0
    %1264 = vmatpush1.msra.mxu0 0.0
    %1265 = vmatprep.subr.mxu0 0.0
    %1266 = vmatpush1.msra.mxu0 0.0
    %1267 = vmatprep.subr.mxu0 0.0
    %1268 = vmatpush1.msra.mxu0 0.0
    %1269 = vmatprep.subr.mxu0 0.0
    %1270 = vmatpush1.msra.mxu0 0.0
    %1271 = vmatprep.subr.mxu0 0.0
    %1272 = vmatpush1.msra.mxu0 0.0
    %1273 = vmatprep.subr.mxu0 0.0
    %1274 = vmatpush1.msra.mxu0 0.0
    %1275 = vmatprep.subr.mxu0 0.0
    %1276 = vmatpush1.msra.mxu0 0.0
    %1277 = vmatprep.subr.mxu0 0.0
    %1278 = vmatpush1.msra.mxu0 0.0
    %1279 = vmatprep.subr.mxu0 0.0
    %1280 = vmatpush1.msra.mxu0 0.0
    %1281 = vmatprep.subr.mxu0 0.0
    %1282 = vmatpush1.msra.mxu0 0.0
    %1283 = vmatprep.subr.mxu0 0.0
    %1284 = vmatpush1.msra.mxu0 0.0
    %1285 = vmatprep.subr.mxu0 0.0
    %1286 = vmatpush1.msra.mxu0 0.0
    %1287 = vmatprep.subr.mxu0 0.0
    %1288 = vmatpush1.msra.mxu0 0.0
    %1289 = vmatprep.subr.mxu0 0.0
    %1290 = vmatpush1.msra.mxu0 0.0
    %1291 = vmatprep.subr.mxu0 0.0
    %1292 = vmatpush1.msra.mxu0 0.0
    %1293 = vmatprep.subr.mxu0 0.0
    %1294 = vmatpush1.msra.mxu0 0.0
    %1295 = vmatprep.subr.mxu0 0.0
    %1296 = vmatpush1.msra.mxu0 0.0
    %1297 = vmatprep.mubr.f32.mxu0 0.0
    %1298 = vmatmul.mubr.f32.gmra.mrb[0].mxu0 %v1210
    %v1299 = vpop.f32.mrb[0].mxu0
    %v1300 = vadd.f32 0.0, %v1299
    %v1301 = vpop.f32.mrb[0].mxu0
    %v1302 = vadd.f32 0.0, %v1301
    %1303 = vmatprep.mubr.f32.mxu0 0.0
    %1304 = vmatmul.mubr.f32.gmra.mrb[0].mxu0 %v1213
    %v1305 = vpop.f32.mrb[0].mxu0
    %v1306 = vadd.f32 0.0, %v1305
    %v1307 = vpop.f32.mrb[0].mxu0
    %v1308 = vadd.f32 0.0, %v1307
    %1309 = vmatprep.mubr.f32.mxu0 0.0
    %1310 = vmatmul.mubr.f32.gmra.mrb[0].mxu0 %v1216
    %v1311 = vpop.f32.mrb[0].mxu0
    %v1312 = vadd.f32 0.0, %v1311
    %v1313 = vpop.f32.mrb[0].mxu0
    %v1314 = vadd.f32 0.0, %v1313
    %1315 = vmatprep.mubr.f32.mxu0 0.0
    %1316 = vmatmul.mubr.f32.gmra.mrb[0].mxu0 %v1219
    %v1317 = vpop.f32.mrb[0].mxu0
    %v1318 = vadd.f32 0.0, %v1317
    %v1319 = vpop.f32.mrb[0].mxu0
    %v1320 = vadd.f32 0.0, %v1319
    %1321 = vmatprep.mubr.f32.mxu0 0.0
    %1322 = vmatmul.mubr.f32.gmra.mrb[0].mxu0 %v1222
    %v1323 = vpop.f32.mrb[0].mxu0
    %v1324 = vadd.f32 0.0, %v1323
    %v1325 = vpop.f32.mrb[0].mxu0
    %v1326 = vadd.f32 0.0, %v1325
    %1327 = vmatprep.mubr.f32.mxu0 0.0
    %1328 = vmatmul.mubr.f32.gmra.mrb[0].mxu0 %v1225
    %v1329 = vpop.f32.mrb[0].mxu0
    %v1330 = vadd.f32 0.0, %v1329
    %v1331 = vpop.f32.mrb[0].mxu0
    %v1332 = vadd.f32 0.0, %v1331
    %1333 = vmatprep.mubr.f32.mxu0 0.0
    %1334 = vmatmul.mubr.f32.gmra.mrb[0].mxu0 %v1228
    %v1335 = vpop.f32.mrb[0].mxu0
    %v1336 = vadd.f32 0.0, %v1335
    %v1337 = vpop.f32.mrb[0].mxu0
    %v1338 = vadd.f32 0.0, %v1337
    %1339 = vmatprep.mubr.f32.mxu0 0.0
    %1340 = vmatmul.mubr.f32.gmra.mrb[0].mxu0 %v1231
    %v1341 = vpop.f32.mrb[0].mxu0
    %v1342 = vadd.f32 0.0, %v1341
    %v1343 = vpop.f32.mrb[0].mxu0
    %v1344 = vadd.f32 0.0, %v1343
    %1345 = vdwg.mxu0
    %v1346 = vmul.f32 %v1048, %v1300
    %v1347 = vmul.f32 %v1049, %v1302
    %v1348 = vmul.f32 %v1050, %v1306
    %v1349 = vmul.f32 %v1051, %v1308
    %v1350 = vmul.f32 %v1052, %v1312
    %v1351 = vmul.f32 %v1053, %v1314
    %v1352 = vmul.f32 %v1054, %v1318
    %v1353 = vmul.f32 %v1055, %v1320
    %v1354 = vmul.f32 %v1056, %v1324
    %v1355 = vmul.f32 %v1057, %v1326
    %v1356 = vmul.f32 %v1058, %v1330
    %v1357 = vmul.f32 %v1059, %v1332
    %v1358 = vmul.f32 %v1060, %v1336
    %v1359 = vmul.f32 %v1061, %v1338
    %v1360 = vmul.f32 %v1062, %v1342
    %v1361 = vmul.f32 %v1063, %v1344
    %v1362 = vld [vmem:[#allocation4] sm:$0xff]
    %v1363 = vld [vmem:[#allocation4 + $0x8] sm:$0xff]
    %v1364 = vld [vmem:[#allocation4 + $0x10] sm:$0xff]
    %v1365 = vld [vmem:[#allocation4 + $0x18] sm:$0xff]
    %v1366 = vld [vmem:[#allocation4 + $0x20] sm:$0xff]
    %v1367 = vld [vmem:[#allocation4 + $0x28] sm:$0xff]
    %v1368 = vld [vmem:[#allocation4 + $0x30] sm:$0xff]
    %v1369 = vld [vmem:[#allocation4 + $0x38] sm:$0xff]
    %v1370 = vld [vmem:[%s13] sm:$0xff]
    %v1371 = vld [vmem:[%s13 + $0x8] sm:$0xff]
    %v1372 = vld [vmem:[%s13 + $0x10] sm:$0xff]
    %v1373 = vld [vmem:[%s13 + $0x18] sm:$0xff]
    %v1374 = vld [vmem:[%s13 + $0x20] sm:$0xff]
    %v1375 = vld [vmem:[%s13 + $0x28] sm:$0xff]
    %v1376 = vld [vmem:[%s13 + $0x30] sm:$0xff]
    %v1377 = vld [vmem:[%s13 + $0x38] sm:$0xff]
    %v1379 = vsel %vm204, %v1362, 0
    %v1382 = vsel %vm204, %v1363, 0
    %v1385 = vsel %vm204, %v1364, 0
    %v1388 = vsel %vm204, %v1365, 0
    %v1391 = vsel %vm204, %v1366, 0
    %v1394 = vsel %vm204, %v1367, 0
    %v1397 = vsel %vm204, %v1368, 0
    %v1400 = vsel %vm204, %v1369, 0
    %1402 = vmatprep.subr.mxu0 %v1371
    %1403 = vmatpush1.msra.mxu0 %v1370
    %1404 = vmatprep.subr.mxu0 %v1373
    %1405 = vmatpush1.msra.mxu0 %v1372
    %1406 = vmatprep.subr.mxu0 %v1375
    %1407 = vmatpush1.msra.mxu0 %v1374
    %1408 = vmatprep.subr.mxu0 %v1377
    %1409 = vmatpush1.msra.mxu0 %v1376
    %1410 = vmatprep.subr.mxu0 0.0
    %1411 = vmatpush1.msra.mxu0 0.0
    %1412 = vmatprep.subr.mxu0 0.0
    %1413 = vmatpush1.msra.mxu0 0.0
    %1414 = vmatprep.subr.mxu0 0.0
    %1415 = vmatpush1.msra.mxu0 0.0
    %1416 = vmatprep.subr.mxu0 0.0
    %1417 = vmatpush1.msra.mxu0 0.0
    %1418 = vmatprep.subr.mxu0 0.0
    %1419 = vmatpush1.msra.mxu0 0.0
    %1420 = vmatprep.subr.mxu0 0.0
    %1421 = vmatpush1.msra.mxu0 0.0
    %1422 = vmatprep.subr.mxu0 0.0
    %1423 = vmatpush1.msra.mxu0 0.0
    %1424 = vmatprep.subr.mxu0 0.0
    %1425 = vmatpush1.msra.mxu0 0.0
    %1426 = vmatprep.subr.mxu0 0.0
    %1427 = vmatpush1.msra.mxu0 0.0
    %1428 = vmatprep.subr.mxu0 0.0
    %1429 = vmatpush1.msra.mxu0 0.0
    %1430 = vmatprep.subr.mxu0 0.0
    %1431 = vmatpush1.msra.mxu0 0.0
    %1432 = vmatprep.subr.mxu0 0.0
    %1433 = vmatpush1.msra.mxu0 0.0
    %1434 = vmatprep.subr.mxu0 0.0
    %1435 = vmatpush1.msra.mxu0 0.0
    %1436 = vmatprep.subr.mxu0 0.0
    %1437 = vmatpush1.msra.mxu0 0.0
    %1438 = vmatprep.subr.mxu0 0.0
    %1439 = vmatpush1.msra.mxu0 0.0
    %1440 = vmatprep.subr.mxu0 0.0
    %1441 = vmatpush1.msra.mxu0 0.0
    %1442 = vmatprep.subr.mxu0 0.0
    %1443 = vmatpush1.msra.mxu0 0.0
    %1444 = vmatprep.subr.mxu0 0.0
    %1445 = vmatpush1.msra.mxu0 0.0
    %1446 = vmatprep.subr.mxu0 0.0
    %1447 = vmatpush1.msra.mxu0 0.0
    %1448 = vmatprep.subr.mxu0 0.0
    %1449 = vmatpush1.msra.mxu0 0.0
    %1450 = vmatprep.subr.mxu0 0.0
    %1451 = vmatpush1.msra.mxu0 0.0
    %1452 = vmatprep.subr.mxu0 0.0
    %1453 = vmatpush1.msra.mxu0 0.0
    %1454 = vmatprep.subr.mxu0 0.0
    %1455 = vmatpush1.msra.mxu0 0.0
    %1456 = vmatprep.subr.mxu0 0.0
    %1457 = vmatpush1.msra.mxu0 0.0
    %1458 = vmatprep.subr.mxu0 0.0
    %1459 = vmatpush1.msra.mxu0 0.0
    %1460 = vmatprep.subr.mxu0 0.0
    %1461 = vmatpush1.msra.mxu0 0.0
    %1462 = vmatprep.subr.mxu0 0.0
    %1463 = vmatpush1.msra.mxu0 0.0
    %1464 = vmatprep.subr.mxu0 0.0
    %1465 = vmatpush1.msra.mxu0 0.0
    %1466 = vmatprep.mubr.f32.mxu0 0.0
    %1467 = vmatmul.mubr.f32.gmra.mrb[0].mxu0 %v1379
    %v1468 = vpop.f32.mrb[0].mxu0
    %v1469 = vadd.f32 0.0, %v1468
    %v1470 = vpop.f32.mrb[0].mxu0
    %v1471 = vadd.f32 0.0, %v1470
    %1472 = vmatprep.mubr.f32.mxu0 0.0
    %1473 = vmatmul.mubr.f32.gmra.mrb[0].mxu0 %v1382
    %v1474 = vpop.f32.mrb[0].mxu0
    %v1475 = vadd.f32 0.0, %v1474
    %v1476 = vpop.f32.mrb[0].mxu0
    %v1477 = vadd.f32 0.0, %v1476
    %1478 = vmatprep.mubr.f32.mxu0 0.0
    %1479 = vmatmul.mubr.f32.gmra.mrb[0].mxu0 %v1385
    %v1480 = vpop.f32.mrb[0].mxu0
    %v1481 = vadd.f32 0.0, %v1480
    %v1482 = vpop.f32.mrb[0].mxu0
    %v1483 = vadd.f32 0.0, %v1482
    %1484 = vmatprep.mubr.f32.mxu0 0.0
    %1485 = vmatmul.mubr.f32.gmra.mrb[0].mxu0 %v1388
    %v1486 = vpop.f32.mrb[0].mxu0
    %v1487 = vadd.f32 0.0, %v1486
    %v1488 = vpop.f32.mrb[0].mxu0
    %v1489 = vadd.f32 0.0, %v1488
    %1490 = vmatprep.mubr.f32.mxu0 0.0
    %1491 = vmatmul.mubr.f32.gmra.mrb[0].mxu0 %v1391
    %v1492 = vpop.f32.mrb[0].mxu0
    %v1493 = vadd.f32 0.0, %v1492
    %v1494 = vpop.f32.mrb[0].mxu0
    %v1495 = vadd.f32 0.0, %v1494
    %1496 = vmatprep.mubr.f32.mxu0 0.0
    %1497 = vmatmul.mubr.f32.gmra.mrb[0].mxu0 %v1394
    %v1498 = vpop.f32.mrb[0].mxu0
    %v1499 = vadd.f32 0.0, %v1498
    %v1500 = vpop.f32.mrb[0].mxu0
    %v1501 = vadd.f32 0.0, %v1500
    %1502 = vmatprep.mubr.f32.mxu0 0.0
    %1503 = vmatmul.mubr.f32.gmra.mrb[0].mxu0 %v1397
    %v1504 = vpop.f32.mrb[0].mxu0
    %v1505 = vadd.f32 0.0, %v1504
    %v1506 = vpop.f32.mrb[0].mxu0
    %v1507 = vadd.f32 0.0, %v1506
    %1508 = vmatprep.mubr.f32.mxu0 0.0
    %1509 = vmatmul.mubr.f32.gmra.mrb[0].mxu0 %v1400
    %v1510 = vpop.f32.mrb[0].mxu0
    %v1511 = vadd.f32 0.0, %v1510
    %v1512 = vpop.f32.mrb[0].mxu0
    %v1513 = vadd.f32 0.0, %v1512
    %1514 = vdwg.mxu0
    %v1515 = vmul.f32 %v1346, %v1469
    %v1516 = vmul.f32 %v1347, %v1471
    %v1517 = vmul.f32 %v1348, %v1475
    %v1518 = vmul.f32 %v1349, %v1477
    %v1519 = vmul.f32 %v1350, %v1481
    %v1520 = vmul.f32 %v1351, %v1483
    %v1521 = vmul.f32 %v1352, %v1487
    %v1522 = vmul.f32 %v1353, %v1489
    %v1523 = vmul.f32 %v1354, %v1493
    %v1524 = vmul.f32 %v1355, %v1495
    %v1525 = vmul.f32 %v1356, %v1499
    %v1526 = vmul.f32 %v1357, %v1501
    %v1527 = vmul.f32 %v1358, %v1505
    %v1528 = vmul.f32 %v1359, %v1507
    %v1529 = vmul.f32 %v1360, %v1511
    %v1530 = vmul.f32 %v1361, %v1513
    %1531 = vmatprep.subr.mxu0 0.0
    %1532 = vmatpush1.msra.mxu0 %v763
    %1533 = vmatprep.subr.mxu0 0.0
    %1534 = vmatpush1.msra.mxu0 %v764
    %1535 = vmatprep.subr.mxu0 0.0
    %1536 = vmatpush1.msra.mxu0 %v765
    %1537 = vmatprep.subr.mxu0 0.0
    %1538 = vmatpush1.msra.mxu0 %v766
    %1539 = vmatprep.subr.mxu0 0.0
    %1540 = vmatpush1.msra.mxu0 %v767
    %1541 = vmatprep.subr.mxu0 0.0
    %1542 = vmatpush1.msra.mxu0 %v768
    %1543 = vmatprep.subr.mxu0 0.0
    %1544 = vmatpush1.msra.mxu0 %v769
    %1545 = vmatprep.subr.mxu0 0.0
    %1546 = vmatpush1.msra.mxu0 %v770
    %1547 = vmatprep.subr.mxu0 0.0
    %1548 = vmatpush1.msra.mxu0 %v771
    %1549 = vmatprep.subr.mxu0 0.0
    %1550 = vmatpush1.msra.mxu0 %v772
    %1551 = vmatprep.subr.mxu0 0.0
    %1552 = vmatpush1.msra.mxu0 %v773
    %1553 = vmatprep.subr.mxu0 0.0
    %1554 = vmatpush1.msra.mxu0 %v774
    %1555 = vmatprep.subr.mxu0 0.0
    %1556 = vmatpush1.msra.mxu0 %v775
    %1557 = vmatprep.subr.mxu0 0.0
    %1558 = vmatpush1.msra.mxu0 %v776
    %1559 = vmatprep.subr.mxu0 0.0
    %1560 = vmatpush1.msra.mxu0 %v777
    %1561 = vmatprep.subr.mxu0 0.0
    %1562 = vmatpush1.msra.mxu0 %v778
    %1563 = vmatprep.subr.mxu0 0.0
    %1564 = vmatpush1.msra.mxu0 %v779
    %1565 = vmatprep.subr.mxu0 0.0
    %1566 = vmatpush1.msra.mxu0 %v780
    %1567 = vmatprep.subr.mxu0 0.0
    %1568 = vmatpush1.msra.mxu0 %v781
    %1569 = vmatprep.subr.mxu0 0.0
    %1570 = vmatpush1.msra.mxu0 %v782
    %1571 = vmatprep.subr.mxu0 0.0
    %1572 = vmatpush1.msra.mxu0 %v783
    %1573 = vmatprep.subr.mxu0 0.0
    %1574 = vmatpush1.msra.mxu0 %v784
    %1575 = vmatprep.subr.mxu0 0.0
    %1576 = vmatpush1.msra.mxu0 %v785
    %1577 = vmatprep.subr.mxu0 0.0
    %1578 = vmatpush1.msra.mxu0 %v786
    %1579 = vmatprep.subr.mxu0 0.0
    %1580 = vmatpush1.msra.mxu0 %v787
    %1581 = vmatprep.subr.mxu0 0.0
    %1582 = vmatpush1.msra.mxu0 %v788
    %1583 = vmatprep.subr.mxu0 0.0
    %1584 = vmatpush1.msra.mxu0 %v789
    %1585 = vmatprep.subr.mxu0 0.0
    %1586 = vmatpush1.msra.mxu0 %v790
    %1587 = vmatprep.subr.mxu0 0.0
    %1588 = vmatpush1.msra.mxu0 %v791
    %1589 = vmatprep.subr.mxu0 0.0
    %1590 = vmatpush1.msra.mxu0 %v792
    %1591 = vmatprep.subr.mxu0 0.0
    %1592 = vmatpush1.msra.mxu0 %v793
    %1593 = vmatprep.subr.mxu0 0.0
    %1594 = vmatpush1.msra.mxu0 %v794
    %1595 = vmatprep.mubr.f32.mxu0 %v1516
    %1596 = vmatmul.mubr.f32.gmra.mrb[0].mxu0 %v1515
    %v1597 = vpop.f32.mrb[0].mxu0
    %v1598 = vadd.f32 0.0, %v1597
    %v1599 = vpop.f32.mrb[0].mxu0
    %1600 = vmatprep.mubr.f32.mxu0 %v1518
    %1601 = vmatmul.mubr.f32.gmra.mrb[0].mxu0 %v1517
    %v1602 = vpop.f32.mrb[0].mxu0
    %v1603 = vadd.f32 0.0, %v1602
    %v1604 = vpop.f32.mrb[0].mxu0
    %1605 = vmatprep.mubr.f32.mxu0 %v1520
    %1606 = vmatmul.mubr.f32.gmra.mrb[0].mxu0 %v1519
    %v1607 = vpop.f32.mrb[0].mxu0
    %v1608 = vadd.f32 0.0, %v1607
    %v1609 = vpop.f32.mrb[0].mxu0
    %1610 = vmatprep.mubr.f32.mxu0 %v1522
    %1611 = vmatmul.mubr.f32.gmra.mrb[0].mxu0 %v1521
    %v1612 = vpop.f32.mrb[0].mxu0
    %v1613 = vadd.f32 0.0, %v1612
    %v1614 = vpop.f32.mrb[0].mxu0
    %1615 = vmatprep.mubr.f32.mxu0 %v1524
    %1616 = vmatmul.mubr.f32.gmra.mrb[0].mxu0 %v1523
    %v1617 = vpop.f32.mrb[0].mxu0
    %v1618 = vadd.f32 0.0, %v1617
    %v1619 = vpop.f32.mrb[0].mxu0
    %1620 = vmatprep.mubr.f32.mxu0 %v1526
    %1621 = vmatmul.mubr.f32.gmra.mrb[0].mxu0 %v1525
    %v1622 = vpop.f32.mrb[0].mxu0
    %v1623 = vadd.f32 0.0, %v1622
    %v1624 = vpop.f32.mrb[0].mxu0
    %1625 = vmatprep.mubr.f32.mxu0 %v1528
    %1626 = vmatmul.mubr.f32.gmra.mrb[0].mxu0 %v1527
    %v1627 = vpop.f32.mrb[0].mxu0
    %v1628 = vadd.f32 0.0, %v1627
    %v1629 = vpop.f32.mrb[0].mxu0
    %1630 = vmatprep.mubr.f32.mxu0 %v1530
    %1631 = vmatmul.mubr.f32.gmra.mrb[0].mxu0 %v1529
    %v1632 = vpop.f32.mrb[0].mxu0
    %v1633 = vadd.f32 0.0, %v1632
    %v1634 = vpop.f32.mrb[0].mxu0
    %1635 = vdwg.mxu0
    %1636 = vst.msk [vmem:[%s14] sm:$0xff] %vm910, %v1598
    %1637 = vst.msk [vmem:[%s14 + $0x8] sm:$0xff] %vm910, %v1603
    %1638 = vst.msk [vmem:[%s14 + $0x10] sm:$0xff] %vm910, %v1608
    %1639 = vst.msk [vmem:[%s14 + $0x18] sm:$0xff] %vm910, %v1613
    %1640 = vst.msk [vmem:[%s14 + $0x20] sm:$0xff] %vm910, %v1618
    %1641 = vst.msk [vmem:[%s14 + $0x28] sm:$0xff] %vm910, %v1623
    %1642 = vst.msk [vmem:[%s14 + $0x30] sm:$0xff] %vm910, %v1628
    %1643 = vst.msk [vmem:[%s14 + $0x38] sm:$0xff] %vm910, %v1633
    // Predicated region
    $region69: #{tpu_custom_call.1} parent=1 // pred_check
      _
    $region70: #{tpu_custom_call.1} parent=1 // pred_check_branch
      %1645 = sbr.rel (0) target = $region72
    $region71: #{tpu_custom_call.1} parent=1 // pred_region
      _
    $region72: #{tpu_custom_call.1} parent=1 // pred_fallthru
      _
    // Predicated region
    $region73: #{tpu_custom_call.1} parent=1 // pred_check
      _
    $region74: #{tpu_custom_call.1} parent=1 // pred_check_branch
      %1647 = sbr.rel (0) target = $region76
    $region75: #{tpu_custom_call.1} parent=1 // pred_region
      %s1649 = ssub.s32 128, 128
      %1650 = vsyncadd [#allocation7], %s1649
      %s1652 = sshll.u32 [#allocation6], 4
      %s1653 = int_to_ptr.vmem [resolvable:$true] %s1652
      %1655 = dma.vmem_to_hbm [thread:$0]  %s1653, 128, %s15, [#allocation7]
    $region76: #{tpu_custom_call.1} parent=1 // pred_fallthru
      _
    // Predicated region
    $region77: #{tpu_custom_call.1} parent=1 // pred_check
      _
    $region78: #{tpu_custom_call.1} parent=1 // pred_check_branch
      %1657 = sbr.rel (0) target = $region80
    $region79: #{tpu_custom_call.1} parent=1 // pred_region
      _
    $region80: #{tpu_custom_call.1} parent=1 // pred_fallthru
      _
    // Predicated region
    $region81: #{tpu_custom_call.1} parent=1 // pred_check
      _
    $region82: #{tpu_custom_call.1} parent=1 // pred_check_branch
      %1659 = sbr.rel (0) target = $region84
    $region83: #{tpu_custom_call.1} parent=1 // pred_region
      %1660 = dma.done [#allocation7], 128
    $region84: #{tpu_custom_call.1} parent=1 // pred_fallthru
      _
    %1661 = vsyncpa [#allocation7], 1

</llo_original>
